<compile_context>
chip_gen: v5e
topology: v5e:2x2
jax: 0.10.0
libtpu: 0.0.40
codegen_flags: <defaults>
</compile_context>

<pallas_src>
import functools
import numpy as np

import jax
import jax.numpy as jnp
from jax.experimental import pallas as pl
from jax.experimental.pallas import tpu as pltpu

# transition codes (as in spinn.data)
T_SHIFT, T_REDUCE, T_SKIP = 0, 1, 2

# model sizes (small, synthetic)
H = 32                 # composition hidden size (h and c each H dims)
MODEL_DIM = 2 * H      # stack/buffer item = concat(h, c)
TRK = 32               # tracking-LSTM hidden size
PREDICT_USE_CELL = True
TRANSITION_WEIGHT = 1.0

TR_PAD = 128           # transition-net output padded to full lane width (cols 0,1 real)
SLAB_W = 128           # per-step output slab: [h(32) | c(32) | logp(2) | zeros(62)]
B_PAD_MIN = 8          # pad batch (sublane) dim to a full vreg row group


# ----------------------------------------------------------------------------- Pallas kernel

def _layer_norm(x, g, b, eps=1e-3):
  # matches spinn LayerNormalization: torch.std is unbiased (ddof=1), eps added to sigma
  mu = jnp.mean(x, axis=1, keepdims=True)
  var = jnp.sum((x - mu) ** 2, axis=1, keepdims=True) / (x.shape[1] - 1)
  return ((x - mu) / (jnp.sqrt(var) + eps)) * g + b


def _spinn_kernel(idx_ref, buf_ref, ln_g_ref, ln_b_ref, w_trk_ref, b_trk_ref,
                  w_tr_ref, b_tr_ref, w_red_ref, b_red_ref,
                  slab_ref, enc_ref, stk_ref, hc_ref):
  """One grid step = one SPINN transition for the whole (padded) batch.

  State (stack slots + tracker h/c) persists in VMEM scratch across the grid."""
  t = pl.program_id(0)

  @pl.when(t == 0)
  def _init():
    stk_ref[...] = jnp.zeros_like(stk_ref)   # stack slots 0,1 are the [zeros, zeros] pads
    hc_ref[...] = jnp.zeros_like(hc_ref)     # tracker h = c = 0 before the first step

  idx = idx_ref[0]                           # (b_pad, 8) int32 schedule for this step
  act = idx[:, 0:1]                          # action: SHIFT / REDUCE / SKIP
  rb = idx[:, 1:2]                           # buffer-top slot
  rs1 = idx[:, 2:3]                          # stack[-1] slot
  rs2 = idx[:, 3:4]                          # stack[-2] slot
  wr = idx[:, 4:5]                           # stack write slot

  buf = buf_ref[...]                         # (LB, b_pad, 2H)  read-only, VMEM-resident
  stk = stk_ref[...]                         # (LS, b_pad, 2H)  persistent scratch
  lb, bp, md = buf.shape
  ls = stk.shape[0]

  # slot ids generated in-kernel (no iota inputs)
  lb_iota = jax.lax.broadcasted_iota(jnp.int32, (lb, bp, md), 0)
  ls_iota = jax.lax.broadcasted_iota(jnp.int32, (ls, bp, md), 0)

  # vectorized per-example gathers via one-hot slot masks (no dynamic slicing)
  top_buf = jnp.sum(jnp.where(lb_iota == rb, buf, 0.0), axis=0)    # (b_pad, 2H)
  top_s1 = jnp.sum(jnp.where(ls_iota == rs1, stk, 0.0), axis=0)    # stack[-1]
  top_s2 = jnp.sum(jnp.where(ls_iota == rs2, stk, 0.0), axis=0)    # stack[-2]

  hc_prev = hc_ref[...]                      # (b_pad, 2*TRK)
  h_prev = hc_prev[:, :TRK]
  c_prev = hc_prev[:, TRK:]

  # ---- tracker: 3 LayerNorms + ONE fused 128-wide MXU contraction + LSTM cell ----
  xb = _layer_norm(top_buf[:, :H], ln_g_ref[0:1, :], ln_b_ref[0:1, :])
  x1 = _layer_norm(top_s1[:, :H], ln_g_ref[1:2, :], ln_b_ref[1:2, :])
  x2 = _layer_norm(top_s2[:, :H], ln_g_ref[2:3, :], ln_b_ref[2:3, :])
  xcat = jnp.concatenate([xb, x1, x2, h_prev], axis=1)             # (b_pad, 3H+TRK = 128)
  gates = (jnp.dot(xcat, w_trk_ref[...], preferred_element_type=jnp.float32)
           + b_trk_ref[...])                                       # (b_pad, 4*TRK)
  a_g = gates[:, 0 * TRK:1 * TRK]
  i_g = gates[:, 1 * TRK:2 * TRK]
  f_g = gates[:, 2 * TRK:3 * TRK]
  o_g = gates[:, 3 * TRK:4 * TRK]
  c_new = jnp.tanh(a_g) * jax.nn.sigmoid(i_g) + jax.nn.sigmoid(f_g) * c_prev
  h_new = jax.nn.sigmoid(o_g) * jnp.tanh(c_new)
  hc_new = jnp.concatenate([h_new, c_new], axis=1)                 # (b_pad, 2*TRK)
  hc_ref[...] = hc_new

  # ---- transition log-probs: single dot on [h, c]; log-softmax over the 2 real lanes ----
  logits = (jnp.dot(hc_new, w_tr_ref[...], preferred_element_type=jnp.float32)
            + b_tr_ref[...])                                       # (b_pad, 128), cols 0,1 real
  l2 = logits[:, 0:2]
  m = jnp.max(l2, axis=1, keepdims=True)
  z = l2 - m
  logp = z - jnp.log(jnp.sum(jnp.exp(z), axis=1, keepdims=True))   # (b_pad, 2)

  # lane-dense 128-wide per-step output slab [h | c | logp | zeros]
  pad = jnp.zeros((bp, SLAB_W - 2 * TRK - 2), jnp.float32)
  slab_ref[0] = jnp.concatenate([hc_new, logp, pad], axis=1)

  # ---- TreeLSTM composition (computed for all rows; only REDUCE rows get written) ----
  lh, lc = top_s2[:, :H], top_s2[:, H:]
  rh, rc = top_s1[:, :H], top_s1[:, H:]
  rin = jnp.concatenate([lh, rh, h_new, c_new], axis=1)            # (b_pad, 128)
  rg = (jnp.dot(rin, w_red_ref[...], preferred_element_type=jnp.float32)
        + b_red_ref[...])                                          # (b_pad, 5H)
  ri = jax.nn.sigmoid(rg[:, 0 * H:1 * H])
  rfl = jax.nn.sigmoid(rg[:, 1 * H:2 * H])
  rfr = jax.nn.sigmoid(rg[:, 2 * H:3 * H])
  ru = jnp.tanh(rg[:, 3 * H:4 * H])
  ro = jax.nn.sigmoid(rg[:, 4 * H:5 * H])
  c_red = rfl * lc + rfr * rc + ri * ru
  h_red = ro * jnp.tanh(c_red)
  reduced = jnp.concatenate([h_red, c_red], axis=1)                # (b_pad, 2H)

  # ---- masked scatter write-back: SHIFT pushes buffer top, REDUCE pushes composition,
  #      SKIP rows untouched; one dense store of the full stack scratch. ----
  new_item = jnp.where(act == T_REDUCE, reduced, top_buf)          # (b_pad, 2H)
  write_mask = jnp.logical_and(ls_iota == wr, act != T_SKIP)       # (LS, b_pad, 2H)
  stk_new = jnp.where(write_mask, new_item, stk)
  stk_ref[...] = stk_new

  # ---- final sentence encodings (top of each stack) gathered in-kernel at the last step ----
  @pl.when(t == pl.num_programs(0) - 1)
  def _final():
    enc_slot = idx[:, 5:6]
    enc_ref[...] = jnp.sum(jnp.where(ls_iota == enc_slot, stk_new, 0.0), axis=0)


@functools.partial(jax.jit, static_argnames=("num_stack_slots",))
def _spinn_run(idx, buf, ln_g, ln_b, w_trk, b_trk, w_tr, b_tr, w_red, b_red,
               *, num_stack_slots):
  t_steps, b_pad, idx_w = idx.shape
  lb = buf.shape[0]

  grid_spec = pltpu.PrefetchScalarGridSpec(
      num_scalar_prefetch=0,
      grid=(t_steps,),
      in_specs=[
          # per-step schedule: one tiny (b_pad, 8) block streamed per grid step
          pl.BlockSpec((1, b_pad, idx_w), lambda t: (t, 0, 0)),
          # read-only token buffer + all weights: constant index_map -> DMA'd once,
          # VMEM-resident for the whole parse
          pl.BlockSpec((lb, b_pad, MODEL_DIM), lambda t: (0, 0, 0)),
          pl.BlockSpec(ln_g.shape, lambda t: (0, 0)),
          pl.BlockSpec(ln_b.shape, lambda t: (0, 0)),
          pl.BlockSpec(w_trk.shape, lambda t: (0, 0)),
          pl.BlockSpec(b_trk.shape, lambda t: (0, 0)),
          pl.BlockSpec(w_tr.shape, lambda t: (0, 0)),
          pl.BlockSpec(b_tr.shape, lambda t: (0, 0)),
          pl.BlockSpec(w_red.shape, lambda t: (0, 0)),
          pl.BlockSpec(b_red.shape, lambda t: (0, 0)),
      ],
      out_specs=[
          pl.BlockSpec((1, b_pad, SLAB_W), lambda t: (t, 0, 0)),     # per-step slab
          pl.BlockSpec((b_pad, MODEL_DIM), lambda t: (0, 0)),        # final encodings
      ],
      scratch_shapes=[
          pltpu.VMEM((num_stack_slots, b_pad, MODEL_DIM), jnp.float32),  # persistent stack
          pltpu.VMEM((b_pad, 2 * TRK), jnp.float32),                     # persistent (h, c)
      ],
  )
  return pl.pallas_call(
      _spinn_kernel,
      grid_spec=grid_spec,
      out_shape=(jax.ShapeDtypeStruct((t_steps, b_pad, SLAB_W), jnp.float32),
                 jax.ShapeDtypeStruct((b_pad, MODEL_DIM), jnp.float32)),
      compiler_params=pltpu.CompilerParams(dimension_semantics=("arbitrary",)),
  )(idx, buf, ln_g, ln_b, w_trk, b_trk, w_tr, b_tr, w_red, b_red)


# ----------------------------------------------------------------------------- parameters

def init_params(key):
  ks = jax.random.split(key, 10)

  def lin(k, fan_in, fan_out):
    return (jax.random.normal(k, (fan_in, fan_out), jnp.float32)
            * (1.0 / np.sqrt(fan_in)))

  w_buf = lin(ks[0], H, 4 * TRK)
  w_s1 = lin(ks[1], H, 4 * TRK)
  w_s2 = lin(ks[2], H, 4 * TRK)
  w_lat = lin(ks[3], TRK, 4 * TRK)
  w_tr = lin(ks[4], 2 * TRK if PREDICT_USE_CELL else TRK, 2)
  w_left = lin(ks[5], H, 5 * H)
  w_right = lin(ks[6], H, 5 * H)
  w_track = lin(ks[7], TRK, 5 * H)

  p = {}
  # tracker layer norms (rows: buf, stack1, stack2)
  p["ln_g"] = jnp.ones((3, H), jnp.float32)
  p["ln_b"] = jnp.zeros((3, H), jnp.float32)
  # fused tracker input weight: rows [w_buf; w_s1; w_s2; w_lateral] -> (3H+TRK=128, 4*TRK)
  p["w_trk"] = jnp.concatenate([w_buf, w_s1, w_s2, w_lat], axis=0)
  p["b_trk"] = jnp.zeros((1, 4 * TRK), jnp.float32)
  # transition net on [h, c]: (2*TRK, 128); only cols 0,1 are real, rest are zero pads
  p["w_tr"] = jnp.zeros((2 * TRK, TR_PAD), jnp.float32).at[:, :2].set(w_tr)
  p["b_tr"] = jnp.zeros((1, TR_PAD), jnp.float32)
  # fused TreeLSTM reduce weight: rows [w_left; w_right; w_track; 0] -> (128, 5H)
  p["w_red"] = jnp.concatenate(
      [w_left, w_right, w_track, jnp.zeros((TRK, 5 * H), jnp.float32)], axis=0)
  p["b_red"] = jnp.zeros((1, 5 * H), jnp.float32)
  return p


# ----------------------------------------------------------------------------- host-side SPINN

class SPINNPallas:
  """Mirrors SPINN.forward / SPINN.run. The entire transition loop is one fused
  Pallas kernel; validation / accuracy / NLL are computed once afterwards from a
  single device->host transfer of the per-step log-prob slab."""

  def __init__(self, params, transition_weight=TRANSITION_WEIGHT):
    self.params = params
    self.transition_weight = transition_weight

  def forward(self, tokens, bufs, transitions):
    tokens = np.asarray(tokens)
    transitions = np.asarray(transitions)
    B, S = tokens.shape
    num_transitions = transitions.shape[1]
    n_tokens = (tokens != 0).sum(axis=1).astype(np.int64)

    b_pad = max(B_PAD_MIN, ((B + 7) // 8) * 8)
    lb = S + 1            # buffer slots: [zeros] + up to S tokens
    ls = S + 2            # stack slots : [zeros, zeros] + up to S pushes

    # dense buffer: (slot, example, 2H); slot 0 = zeros pad, top at slot n_tokens
    buf_np = np.zeros((lb, b_pad, MODEL_DIM), np.float32)
    for b in range(B):
      n = int(n_tokens[b])
      if n > 0:
        items = bufs[b][-n:]
        for k, v in enumerate(items):
          buf_np[k + 1, b, :] = np.asarray(v, dtype=np.float32)
    buf_arr = jnp.asarray(buf_np)

    # host-side pointer bookkeeping -> fully precomputed (T, b_pad, 8) schedule
    buf_ptr = np.zeros((b_pad,), np.int64)
    buf_ptr[:B] = n_tokens                      # buffer top slot (slot 0 = zeros pad)
    stack_ptr = np.full((b_pad,), 1, np.int64)  # [zeros, zeros] -> top at slot 1

    idx_rows = []   # per recorded step: (b_pad, 8) int schedule row
    records = []    # per recorded step: host data for validation / accuracy / loss

    for t_step in range(num_transitions):
      trans = transitions[:, t_step].astype(np.int64)
      cant_skip = trans != T_SKIP
      if cant_skip.sum() == 0:
        continue   # reference: tracker not run, stacks/buffers untouched

      act = np.full((b_pad,), T_SKIP, np.int64)
      act[:B] = trans

      row = np.zeros((b_pad, 8), np.int64)
      row[:, 0] = act
      row[:, 1] = np.maximum(buf_ptr, 0)          # buffer top
      row[:, 2] = np.maximum(stack_ptr, 0)        # stack[-1]
      row[:, 3] = np.maximum(stack_ptr - 1, 0)    # stack[-2]

      # lengths BEFORE this step's updates (what reference validate() sees)
      records.append(dict(
          t_given=trans.copy(),
          t_mask=cant_skip.copy(),
          must_skip=(trans == T_SKIP),
          stack_len=(stack_ptr[:B] - 1).copy(),   # len(stack) - 2 (zero padded)
          buf_len=buf_ptr[:B].copy(),             # len(buf) - 1
      ))

      is_shift = act == T_SHIFT
      is_reduce = act == T_REDUCE
      row[is_shift, 4] = stack_ptr[is_shift] + 1
      row[is_reduce, 4] = np.maximum(stack_ptr[is_reduce] - 1, 0)
      stack_ptr[is_shift] += 1
      stack_ptr[is_reduce] = np.maximum(stack_ptr[is_reduce] - 1, 0)
      buf_ptr[is_shift] = np.maximum(buf_ptr[is_shift] - 1, -1)
      idx_rows.append(row)

    transition_acc = 0.0
    transition_loss = None
    p = self.params

    if idx_rows:
      # last step carries the final stack-top slot for the in-kernel encoding gather
      idx_rows[-1][:, 5] = np.clip(stack_ptr, 0, ls - 1)
      idx_arr = jnp.asarray(np.stack(idx_rows, axis=0).astype(np.int32))

      slab, enc = _spinn_run(
          idx_arr, buf_arr,
          p["ln_g"], p["ln_b"], p["w_trk"], p["b_trk"],
          p["w_tr"], p["b_tr"], p["w_red"], p["b_red"],
          num_stack_slots=ls)

      # ------------- single device->host sync for all transition log-probs -------------
      logp_np = np.asarray(slab[:, :B, 2 * TRK:2 * TRK + 2])    # (T, B, 2)

      t_preds_l, t_given_l, t_mask_l, logp_l = [], [], [], []
      invalid_count = np.zeros(B)
      for r, rec in enumerate(records):
        lp = logp_np[r]
        preds = lp.argmax(axis=1).astype(np.int64)
        cs = rec["t_mask"]
        invalid = np.zeros(B, dtype=bool)

        must_shift = rec["stack_len"] < 2
        invalid |= np.logical_and(preds != T_SHIFT, np.logical_and(cs, must_shift))
        preds[must_shift] = T_SHIFT

        must_reduce = rec["buf_len"] < 1
        invalid |= np.logical_and(preds != T_REDUCE, np.logical_and(cs, must_reduce))
        preds[must_reduce] = T_REDUCE

        preds[rec["must_skip"]] = T_SKIP
        invalid_count += invalid

        t_preds_l.append(preds)
        t_given_l.append(rec["t_given"])
        t_mask_l.append(cs)
        logp_l.append(lp)

      t_preds = np.concatenate(t_preds_l)
      t_given = np.concatenate(t_given_l)
      t_mask = np.concatenate(t_mask_l)
      t_logprobs = np.concatenate(logp_l, axis=0)

      n = t_mask.shape[0]
      n_skips = n - int(t_mask.sum())
      n_total = n - n_skips
      n_correct = int((t_preds == t_given).sum()) - n_skips
      if n_total > 0:
        transition_acc = float(n_correct) / float(n_total)

      sel_logp = t_logprobs[t_mask]
      sel_given = t_given[t_mask].astype(np.int64)
      if sel_given.shape[0] > 0:
        nll = -np.mean(sel_logp[np.arange(sel_given.shape[0]), sel_given])
        transition_loss = jnp.asarray(nll * self.transition_weight, jnp.float32)

      self.n_invalid = int((invalid_count > 0).sum())
      self.invalid = self.n_invalid / float(B)

      encodings = enc[:B]
    else:
      # degenerate all-SKIP input: stacks stay [zeros, zeros]
      encodings = jnp.zeros((B, MODEL_DIM), jnp.float32)

    return encodings, transition_acc, transition_loss


# ----------------------------------------------------------------------------- main

if __name__ == "__main__":
  key = jax.random.PRNGKey(0)
  pkey, dkey = jax.random.split(key)
  params = init_params(pkey)

  B, S = 2, 8
  tokens = np.zeros((B, S), dtype=np.int64)
  tokens[0, -4:] = [5, 6, 7, 8]   # 4 tokens
  tokens[1, -3:] = [3, 4, 5]      # 3 tokens

  emb = np.asarray(jax.random.normal(dkey, (B, S, MODEL_DIM), jnp.float32))
  bufs = [[emb[i, j] for j in range(S)] for i in range(B)]

  # valid shift/reduce sequences, left-padded with SKIP
  transitions = np.array([
      [T_SHIFT, T_SHIFT, T_REDUCE, T_SHIFT, T_REDUCE, T_SHIFT, T_REDUCE],
      [T_SKIP, T_SKIP, T_SHIFT, T_SHIFT, T_REDUCE, T_SHIFT, T_REDUCE],
  ], dtype=np.int32)

  model = SPINNPallas(params, transition_weight=TRANSITION_WEIGHT)
  encodings, acc, loss = model.forward(tokens, bufs, transitions)

  jax.block_until_ready(encodings)
  assert encodings.shape == (B, MODEL_DIM)
  assert np.isfinite(np.asarray(encodings)).all()
  assert loss is not None and np.isfinite(float(loss))
  assert 0.0 <= acc <= 1.0
  print("KERNEL_OK")
</pallas_src>

<mosaic_0001>
module attributes {stable_mosaic.version = 11 : i64} {
  func.func @_spinn_kernel(%arg0: i32, %arg1: memref<1x8x8xi32, #tpu.memory_space<vmem>>, %arg2: memref<9x8x64xf32, #tpu.memory_space<vmem>>, %arg3: memref<3x32xf32, #tpu.memory_space<vmem>>, %arg4: memref<3x32xf32, #tpu.memory_space<vmem>>, %arg5: memref<128x128xf32, #tpu.memory_space<vmem>>, %arg6: memref<1x128xf32, #tpu.memory_space<vmem>>, %arg7: memref<64x128xf32, #tpu.memory_space<vmem>>, %arg8: memref<1x128xf32, #tpu.memory_space<vmem>>, %arg9: memref<128x160xf32, #tpu.memory_space<vmem>>, %arg10: memref<1x160xf32, #tpu.memory_space<vmem>>, %arg11: memref<1x8x128xf32, #tpu.memory_space<vmem>>, %arg12: memref<8x64xf32, #tpu.memory_space<vmem>>, %arg13: memref<10x8x64xf32, #tpu.memory_space<vmem>>, %arg14: memref<8x64xf32, #tpu.memory_space<vmem>>) attributes {dimension_semantics = [#tpu.dimension_semantics<arbitrary>], iteration_bounds = array<i64: 7>, scalar_prefetch = 0 : i64, scratch_operands = 2 : i64, tpu.core_type = #tpu.core_type<tc>, window_params = [{transform_indices = @transform_0, window_bounds = array<i64: 1, 8, 8>}, {pipeline_mode = #tpu.pipeline_mode<synchronous>, transform_indices = @transform_1, window_bounds = array<i64: 9, 8, 64>}, {pipeline_mode = #tpu.pipeline_mode<synchronous>, transform_indices = @transform_2, window_bounds = array<i64: 3, 32>}, {pipeline_mode = #tpu.pipeline_mode<synchronous>, transform_indices = @transform_3, window_bounds = array<i64: 3, 32>}, {pipeline_mode = #tpu.pipeline_mode<synchronous>, transform_indices = @transform_4, window_bounds = array<i64: 128, 128>}, {pipeline_mode = #tpu.pipeline_mode<synchronous>, transform_indices = @transform_5, window_bounds = array<i64: 1, 128>}, {pipeline_mode = #tpu.pipeline_mode<synchronous>, transform_indices = @transform_6, window_bounds = array<i64: 64, 128>}, {pipeline_mode = #tpu.pipeline_mode<synchronous>, transform_indices = @transform_7, window_bounds = array<i64: 1, 128>}, {pipeline_mode = #tpu.pipeline_mode<synchronous>, transform_indices = @transform_8, window_bounds = array<i64: 128, 160>}, {pipeline_mode = #tpu.pipeline_mode<synchronous>, transform_indices = @transform_9, window_bounds = array<i64: 1, 160>}, {transform_indices = @transform_10, window_bounds = array<i64: 1, 8, 128>}, {pipeline_mode = #tpu.pipeline_mode<synchronous>, transform_indices = @transform_11, window_bounds = array<i64: 8, 64>}]} {
    %c0_i32 = arith.constant 0 : i32
    %0 = arith.cmpi eq, %arg0, %c0_i32 : i32
    %1 = arith.extui %0 : i1 to i32
    %c0_i32_0 = arith.constant 0 : i32
    %2 = arith.cmpi ne, %1, %c0_i32_0 : i32
    scf.if %2 {
      %cst_75 = arith.constant 0.000000e+00 : f32
      %228 = vector.broadcast %cst_75 : f32 to vector<10x8x64xf32>
      %c0_76 = arith.constant 0 : index
      %c0_77 = arith.constant 0 : index
      %c0_78 = arith.constant 0 : index
      %229 = vector.load %arg13[%c0_76, %c0_77, %c0_78] : memref<10x8x64xf32, #tpu.memory_space<vmem>>, vector<10x8x64xf32>
      tpu.vector_store %arg13[%c0_76, %c0_77, %c0_78], %228 {strides = array<i32>} : memref<10x8x64xf32, #tpu.memory_space<vmem>>, vector<10x8x64xf32>,
      %cst_79 = arith.constant 0.000000e+00 : f32
      %230 = vector.broadcast %cst_79 : f32 to vector<8x64xf32>
      %c0_80 = arith.constant 0 : index
      %c0_81 = arith.constant 0 : index
      %231 = vector.load %arg14[%c0_80, %c0_81] : memref<8x64xf32, #tpu.memory_space<vmem>>, vector<8x64xf32>
      tpu.vector_store %arg14[%c0_80, %c0_81], %230 {strides = array<i32>} : memref<8x64xf32, #tpu.memory_space<vmem>>, vector<8x64xf32>,
    } else {
    }
    %c0 = arith.constant 0 : index
    %c0_1 = arith.constant 0 : index
    %c0_2 = arith.constant 0 : index
    %3 = vector.load %arg1[%c0, %c0_1, %c0_2] : memref<1x8x8xi32, #tpu.memory_space<vmem>>, vector<1x8x8xi32>
    %4 = vector.shape_cast %3 : vector<1x8x8xi32> to vector<8x8xi32>
    %5 = vector.extract_strided_slice %4 {offsets = [0, 0], sizes = [8, 1], strides = [1, 1]} : vector<8x8xi32> to vector<8x1xi32>
    %6 = vector.extract_strided_slice %4 {offsets = [0, 1], sizes = [8, 1], strides = [1, 1]} : vector<8x8xi32> to vector<8x1xi32>
    %7 = vector.extract_strided_slice %4 {offsets = [0, 2], sizes = [8, 1], strides = [1, 1]} : vector<8x8xi32> to vector<8x1xi32>
    %8 = vector.extract_strided_slice %4 {offsets = [0, 3], sizes = [8, 1], strides = [1, 1]} : vector<8x8xi32> to vector<8x1xi32>
    %9 = vector.extract_strided_slice %4 {offsets = [0, 4], sizes = [8, 1], strides = [1, 1]} : vector<8x8xi32> to vector<8x1xi32>
    %c0_3 = arith.constant 0 : index
    %c0_4 = arith.constant 0 : index
    %c0_5 = arith.constant 0 : index
    %10 = vector.load %arg2[%c0_3, %c0_4, %c0_5] : memref<9x8x64xf32, #tpu.memory_space<vmem>>, vector<9x8x64xf32>
    %c0_6 = arith.constant 0 : index
    %c0_7 = arith.constant 0 : index
    %c0_8 = arith.constant 0 : index
    %11 = vector.load %arg13[%c0_6, %c0_7, %c0_8] : memref<10x8x64xf32, #tpu.memory_space<vmem>>, vector<10x8x64xf32>
    %12 = tpu.iota {dimensions = array<i32: 0>} : vector<9x8x64xi32>
    %13 = tpu.iota {dimensions = array<i32: 0>} : vector<10x8x64xi32>
    %14 = vector.shape_cast %6 : vector<8x1xi32> to vector<1x8x1xi32>
    %15 = vector.broadcast %14 : vector<1x8x1xi32> to vector<9x8x64xi32>
    %16 = arith.cmpi eq, %12, %15 : vector<9x8x64xi32>
    %cst = arith.constant 0.000000e+00 : f32
    %17 = vector.broadcast %cst : f32 to vector<9x8x64xf32>
    %18 = arith.select %16, %10, %17 : vector<9x8x64xi1>, vector<9x8x64xf32>
    %cst_9 = arith.constant dense<0.000000e+00> : vector<8x64xf32>
    %19 = vector.multi_reduction <add>, %18, %cst_9 [0] : vector<9x8x64xf32> to vector<8x64xf32>
    %20 = vector.shape_cast %7 : vector<8x1xi32> to vector<1x8x1xi32>
    %21 = vector.broadcast %20 : vector<1x8x1xi32> to vector<10x8x64xi32>
    %22 = arith.cmpi eq, %13, %21 : vector<10x8x64xi32>
    %cst_10 = arith.constant 0.000000e+00 : f32
    %23 = vector.broadcast %cst_10 : f32 to vector<10x8x64xf32>
    %24 = arith.select %22, %11, %23 : vector<10x8x64xi1>, vector<10x8x64xf32>
    %cst_11 = arith.constant dense<0.000000e+00> : vector<8x64xf32>
    %25 = vector.multi_reduction <add>, %24, %cst_11 [0] : vector<10x8x64xf32> to vector<8x64xf32>
    %26 = vector.shape_cast %8 : vector<8x1xi32> to vector<1x8x1xi32>
    %27 = vector.broadcast %26 : vector<1x8x1xi32> to vector<10x8x64xi32>
    %28 = arith.cmpi eq, %13, %27 : vector<10x8x64xi32>
    %cst_12 = arith.constant 0.000000e+00 : f32
    %29 = vector.broadcast %cst_12 : f32 to vector<10x8x64xf32>
    %30 = arith.select %28, %11, %29 : vector<10x8x64xi1>, vector<10x8x64xf32>
    %cst_13 = arith.constant dense<0.000000e+00> : vector<8x64xf32>
    %31 = vector.multi_reduction <add>, %30, %cst_13 [0] : vector<10x8x64xf32> to vector<8x64xf32>
    %c0_14 = arith.constant 0 : index
    %c0_15 = arith.constant 0 : index
    %32 = vector.load %arg14[%c0_14, %c0_15] : memref<8x64xf32, #tpu.memory_space<vmem>>, vector<8x64xf32>
    %33 = vector.extract_strided_slice %32 {offsets = [0, 0], sizes = [8, 32], strides = [1, 1]} : vector<8x64xf32> to vector<8x32xf32>
    %34 = vector.extract_strided_slice %32 {offsets = [0, 32], sizes = [8, 32], strides = [1, 1]} : vector<8x64xf32> to vector<8x32xf32>
    %35 = vector.extract_strided_slice %19 {offsets = [0, 0], sizes = [8, 32], strides = [1, 1]} : vector<8x64xf32> to vector<8x32xf32>
    %c0_16 = arith.constant 0 : index
    %c0_17 = arith.constant 0 : index
    %36 = vector.load %arg3[%c0_16, %c0_17] : memref<3x32xf32, #tpu.memory_space<vmem>>, vector<1x32xf32>
    %c0_18 = arith.constant 0 : index
    %c0_19 = arith.constant 0 : index
    %37 = vector.load %arg4[%c0_18, %c0_19] : memref<3x32xf32, #tpu.memory_space<vmem>>, vector<1x32xf32>
    %cst_20 = arith.constant dense<0.000000e+00> : vector<8xf32>
    %38 = vector.multi_reduction <add>, %35, %cst_20 [1] : vector<8x32xf32> to vector<8xf32>
    %39 = vector.shape_cast %38 : vector<8xf32> to vector<8x1xf32>
    %cst_21 = arith.constant 3.200000e+01 : f32
    %40 = vector.broadcast %cst_21 : f32 to vector<8x1xf32>
    %41 = arith.divf %39, %40 : vector<8x1xf32>
    %42 = vector.broadcast %41 : vector<8x1xf32> to vector<8x32xf32>
    %43 = arith.subf %35, %42 : vector<8x32xf32>
    %44 = arith.mulf %43, %43 : vector<8x32xf32>
    %cst_22 = arith.constant dense<0.000000e+00> : vector<8xf32>
    %45 = vector.multi_reduction <add>, %44, %cst_22 [1] : vector<8x32xf32> to vector<8xf32>
    %46 = vector.shape_cast %45 : vector<8xf32> to vector<8x1xf32>
    %cst_23 = arith.constant 3.100000e+01 : f32
    %47 = vector.broadcast %cst_23 : f32 to vector<8x1xf32>
    %48 = arith.divf %46, %47 : vector<8x1xf32>
    %49 = vector.broadcast %41 : vector<8x1xf32> to vector<8x32xf32>
    %50 = arith.subf %35, %49 : vector<8x32xf32>
    %51 = math.sqrt %48 : vector<8x1xf32>
    %cst_24 = arith.constant 1.000000e-03 : f32
    %52 = vector.broadcast %cst_24 : f32 to vector<8x1xf32>
    %53 = arith.addf %51, %52 : vector<8x1xf32>
    %54 = vector.broadcast %53 : vector<8x1xf32> to vector<8x32xf32>
    %55 = arith.divf %50, %54 : vector<8x32xf32>
    %56 = vector.broadcast %36 : vector<1x32xf32> to vector<8x32xf32>
    %57 = arith.mulf %55, %56 : vector<8x32xf32>
    %58 = vector.broadcast %37 : vector<1x32xf32> to vector<8x32xf32>
    %59 = arith.addf %57, %58 : vector<8x32xf32>
    %60 = vector.extract_strided_slice %25 {offsets = [0, 0], sizes = [8, 32], strides = [1, 1]} : vector<8x64xf32> to vector<8x32xf32>
    %c1 = arith.constant 1 : index
    %c0_25 = arith.constant 0 : index
    %61 = vector.load %arg3[%c1, %c0_25] : memref<3x32xf32, #tpu.memory_space<vmem>>, vector<1x32xf32>
    %c1_26 = arith.constant 1 : index
    %c0_27 = arith.constant 0 : index
    %62 = vector.load %arg4[%c1_26, %c0_27] : memref<3x32xf32, #tpu.memory_space<vmem>>, vector<1x32xf32>
    %cst_28 = arith.constant dense<0.000000e+00> : vector<8xf32>
    %63 = vector.multi_reduction <add>, %60, %cst_28 [1] : vector<8x32xf32> to vector<8xf32>
    %64 = vector.shape_cast %63 : vector<8xf32> to vector<8x1xf32>
    %cst_29 = arith.constant 3.200000e+01 : f32
    %65 = vector.broadcast %cst_29 : f32 to vector<8x1xf32>
    %66 = arith.divf %64, %65 : vector<8x1xf32>
    %67 = vector.broadcast %66 : vector<8x1xf32> to vector<8x32xf32>
    %68 = arith.subf %60, %67 : vector<8x32xf32>
    %69 = arith.mulf %68, %68 : vector<8x32xf32>
    %cst_30 = arith.constant dense<0.000000e+00> : vector<8xf32>
    %70 = vector.multi_reduction <add>, %69, %cst_30 [1] : vector<8x32xf32> to vector<8xf32>
    %71 = vector.shape_cast %70 : vector<8xf32> to vector<8x1xf32>
    %cst_31 = arith.constant 3.100000e+01 : f32
    %72 = vector.broadcast %cst_31 : f32 to vector<8x1xf32>
    %73 = arith.divf %71, %72 : vector<8x1xf32>
    %74 = vector.broadcast %66 : vector<8x1xf32> to vector<8x32xf32>
    %75 = arith.subf %60, %74 : vector<8x32xf32>
    %76 = math.sqrt %73 : vector<8x1xf32>
    %cst_32 = arith.constant 1.000000e-03 : f32
    %77 = vector.broadcast %cst_32 : f32 to vector<8x1xf32>
    %78 = arith.addf %76, %77 : vector<8x1xf32>
    %79 = vector.broadcast %78 : vector<8x1xf32> to vector<8x32xf32>
    %80 = arith.divf %75, %79 : vector<8x32xf32>
    %81 = vector.broadcast %61 : vector<1x32xf32> to vector<8x32xf32>
    %82 = arith.mulf %80, %81 : vector<8x32xf32>
    %83 = vector.broadcast %62 : vector<1x32xf32> to vector<8x32xf32>
    %84 = arith.addf %82, %83 : vector<8x32xf32>
    %85 = vector.extract_strided_slice %31 {offsets = [0, 0], sizes = [8, 32], strides = [1, 1]} : vector<8x64xf32> to vector<8x32xf32>
    %c2 = arith.constant 2 : index
    %c0_33 = arith.constant 0 : index
    %86 = vector.load %arg3[%c2, %c0_33] : memref<3x32xf32, #tpu.memory_space<vmem>>, vector<1x32xf32>
    %c2_34 = arith.constant 2 : index
    %c0_35 = arith.constant 0 : index
    %87 = vector.load %arg4[%c2_34, %c0_35] : memref<3x32xf32, #tpu.memory_space<vmem>>, vector<1x32xf32>
    %cst_36 = arith.constant dense<0.000000e+00> : vector<8xf32>
    %88 = vector.multi_reduction <add>, %85, %cst_36 [1] : vector<8x32xf32> to vector<8xf32>
    %89 = vector.shape_cast %88 : vector<8xf32> to vector<8x1xf32>
    %cst_37 = arith.constant 3.200000e+01 : f32
    %90 = vector.broadcast %cst_37 : f32 to vector<8x1xf32>
    %91 = arith.divf %89, %90 : vector<8x1xf32>
    %92 = vector.broadcast %91 : vector<8x1xf32> to vector<8x32xf32>
    %93 = arith.subf %85, %92 : vector<8x32xf32>
    %94 = arith.mulf %93, %93 : vector<8x32xf32>
    %cst_38 = arith.constant dense<0.000000e+00> : vector<8xf32>
    %95 = vector.multi_reduction <add>, %94, %cst_38 [1] : vector<8x32xf32> to vector<8xf32>
    %96 = vector.shape_cast %95 : vector<8xf32> to vector<8x1xf32>
    %cst_39 = arith.constant 3.100000e+01 : f32
    %97 = vector.broadcast %cst_39 : f32 to vector<8x1xf32>
    %98 = arith.divf %96, %97 : vector<8x1xf32>
    %99 = vector.broadcast %91 : vector<8x1xf32> to vector<8x32xf32>
    %100 = arith.subf %85, %99 : vector<8x32xf32>
    %101 = math.sqrt %98 : vector<8x1xf32>
    %cst_40 = arith.constant 1.000000e-03 : f32
    %102 = vector.broadcast %cst_40 : f32 to vector<8x1xf32>
    %103 = arith.addf %101, %102 : vector<8x1xf32>
    %104 = vector.broadcast %103 : vector<8x1xf32> to vector<8x32xf32>
    %105 = arith.divf %100, %104 : vector<8x32xf32>
    %106 = vector.broadcast %86 : vector<1x32xf32> to vector<8x32xf32>
    %107 = arith.mulf %105, %106 : vector<8x32xf32>
    %108 = vector.broadcast %87 : vector<1x32xf32> to vector<8x32xf32>
    %109 = arith.addf %107, %108 : vector<8x32xf32>
    %110 = tpu.concatenate %59, %84, %109, %33 in 1 : vector<8x32xf32>, vector<8x32xf32>, vector<8x32xf32>, vector<8x32xf32> -> vector<8x128xf32>
    %c0_41 = arith.constant 0 : index
    %c0_42 = arith.constant 0 : index
    %111 = vector.load %arg5[%c0_41, %c0_42] : memref<128x128xf32, #tpu.memory_space<vmem>>, vector<128x128xf32>
    %cst_43 = arith.constant dense<0.000000e+00> : vector<8x128xf32>
    %112 = tpu.matmul %110, %111, %cst_43 {dimension_numbers = #tpu.dot_dimension_numbers<[1], [0], [0], [1], [0, 0, 1, 1], [], []>} : vector<8x128xf32>, vector<128x128xf32>, vector<8x128xf32> -> vector<8x128xf32>
    %c0_44 = arith.constant 0 : index
    %c0_45 = arith.constant 0 : index
    %113 = vector.load %arg6[%c0_44, %c0_45] : memref<1x128xf32, #tpu.memory_space<vmem>>, vector<1x128xf32>
    %114 = vector.broadcast %113 : vector<1x128xf32> to vector<8x128xf32>
    %115 = arith.addf %112, %114 : vector<8x128xf32>
    %116 = vector.extract_strided_slice %115 {offsets = [0, 0], sizes = [8, 32], strides = [1, 1]} : vector<8x128xf32> to vector<8x32xf32>
    %117 = vector.extract_strided_slice %115 {offsets = [0, 32], sizes = [8, 32], strides = [1, 1]} : vector<8x128xf32> to vector<8x32xf32>
    %118 = vector.extract_strided_slice %115 {offsets = [0, 64], sizes = [8, 32], strides = [1, 1]} : vector<8x128xf32> to vector<8x32xf32>
    %119 = vector.extract_strided_slice %115 {offsets = [0, 96], sizes = [8, 32], strides = [1, 1]} : vector<8x128xf32> to vector<8x32xf32>
    %120 = math.tanh %116 : vector<8x32xf32>
    %121 = arith.negf %117 : vector<8x32xf32>
    %122 = math.exp %121 : vector<8x32xf32>
    %cst_46 = arith.constant 1.000000e+00 : f32
    %123 = vector.broadcast %cst_46 : f32 to vector<8x32xf32>
    %124 = arith.addf %123, %122 : vector<8x32xf32>
    %125 = arith.divf %123, %124 : vector<8x32xf32>
    %126 = arith.mulf %120, %125 : vector<8x32xf32>
    %127 = arith.negf %118 : vector<8x32xf32>
    %128 = math.exp %127 : vector<8x32xf32>
    %cst_47 = arith.constant 1.000000e+00 : f32
    %129 = vector.broadcast %cst_47 : f32 to vector<8x32xf32>
    %130 = arith.addf %129, %128 : vector<8x32xf32>
    %131 = arith.divf %129, %130 : vector<8x32xf32>
    %132 = arith.mulf %131, %34 : vector<8x32xf32>
    %133 = arith.addf %126, %132 : vector<8x32xf32>
    %134 = arith.negf %119 : vector<8x32xf32>
    %135 = math.exp %134 : vector<8x32xf32>
    %cst_48 = arith.constant 1.000000e+00 : f32
    %136 = vector.broadcast %cst_48 : f32 to vector<8x32xf32>
    %137 = arith.addf %136, %135 : vector<8x32xf32>
    %138 = arith.divf %136, %137 : vector<8x32xf32>
    %139 = math.tanh %133 : vector<8x32xf32>
    %140 = arith.mulf %138, %139 : vector<8x32xf32>
    %141 = tpu.concatenate %140, %133 in 1 : vector<8x32xf32>, vector<8x32xf32> -> vector<8x64xf32>
    %c0_49 = arith.constant 0 : index
    %c0_50 = arith.constant 0 : index
    %142 = vector.load %arg14[%c0_49, %c0_50] : memref<8x64xf32, #tpu.memory_space<vmem>>, vector<8x64xf32>
    tpu.vector_store %arg14[%c0_49, %c0_50], %141 {strides = array<i32>} : memref<8x64xf32, #tpu.memory_space<vmem>>, vector<8x64xf32>,
    %c0_51 = arith.constant 0 : index
    %c0_52 = arith.constant 0 : index
    %143 = vector.load %arg7[%c0_51, %c0_52] : memref<64x128xf32, #tpu.memory_space<vmem>>, vector<64x128xf32>
    %cst_53 = arith.constant dense<0.000000e+00> : vector<8x128xf32>
    %144 = tpu.matmul %141, %143, %cst_53 {dimension_numbers = #tpu.dot_dimension_numbers<[1], [0], [0], [1], [0, 0, 1, 1], [], []>} : vector<8x64xf32>, vector<64x128xf32>, vector<8x128xf32> -> vector<8x128xf32>
    %c0_54 = arith.constant 0 : index
    %c0_55 = arith.constant 0 : index
    %145 = vector.load %arg8[%c0_54, %c0_55] : memref<1x128xf32, #tpu.memory_space<vmem>>, vector<1x128xf32>
    %146 = vector.broadcast %145 : vector<1x128xf32> to vector<8x128xf32>
    %147 = arith.addf %144, %146 : vector<8x128xf32>
    %148 = vector.extract_strided_slice %147 {offsets = [0, 0], sizes = [8, 2], strides = [1, 1]} : vector<8x128xf32> to vector<8x2xf32>
    %cst_56 = arith.constant dense<0xFF800000> : vector<8xf32>
    %149 = vector.multi_reduction <maximumf>, %148, %cst_56 [1] : vector<8x2xf32> to vector<8xf32>
    %150 = vector.shape_cast %149 : vector<8xf32> to vector<8x1xf32>
    %151 = vector.broadcast %150 : vector<8x1xf32> to vector<8x2xf32>
    %152 = arith.subf %148, %151 : vector<8x2xf32>
    %153 = math.exp %152 : vector<8x2xf32>
    %cst_57 = arith.constant dense<0.000000e+00> : vector<8xf32>
    %154 = vector.multi_reduction <add>, %153, %cst_57 [1] : vector<8x2xf32> to vector<8xf32>
    %155 = vector.shape_cast %154 : vector<8xf32> to vector<8x1xf32>
    %156 = math.log %155 : vector<8x1xf32>
    %157 = vector.broadcast %156 : vector<8x1xf32> to vector<8x2xf32>
    %158 = arith.subf %152, %157 : vector<8x2xf32>
    %cst_58 = arith.constant 0.000000e+00 : f32
    %159 = vector.broadcast %cst_58 : f32 to vector<8x62xf32>
    %160 = tpu.concatenate %141, %158, %159 in 1 : vector<8x64xf32>, vector<8x2xf32>, vector<8x62xf32> -> vector<8x128xf32>
    %c0_59 = arith.constant 0 : index
    %c0_60 = arith.constant 0 : index
    %c0_61 = arith.constant 0 : index
    %161 = vector.load %arg11[%c0_59, %c0_60, %c0_61] : memref<1x8x128xf32, #tpu.memory_space<vmem>>, vector<1x8x128xf32>
    %162 = vector.shape_cast %161 : vector<1x8x128xf32> to vector<8x128xf32>
    %163 = vector.shape_cast %160 : vector<8x128xf32> to vector<1x8x128xf32>
    tpu.vector_store %arg11[%c0_59, %c0_60, %c0_61], %163 {strides = array<i32>} : memref<1x8x128xf32, #tpu.memory_space<vmem>>, vector<1x8x128xf32>,
    %164 = vector.extract_strided_slice %31 {offsets = [0, 0], sizes = [8, 32], strides = [1, 1]} : vector<8x64xf32> to vector<8x32xf32>
    %165 = vector.extract_strided_slice %31 {offsets = [0, 32], sizes = [8, 32], strides = [1, 1]} : vector<8x64xf32> to vector<8x32xf32>
    %166 = vector.extract_strided_slice %25 {offsets = [0, 0], sizes = [8, 32], strides = [1, 1]} : vector<8x64xf32> to vector<8x32xf32>
    %167 = vector.extract_strided_slice %25 {offsets = [0, 32], sizes = [8, 32], strides = [1, 1]} : vector<8x64xf32> to vector<8x32xf32>
    %168 = tpu.concatenate %164, %166, %140, %133 in 1 : vector<8x32xf32>, vector<8x32xf32>, vector<8x32xf32>, vector<8x32xf32> -> vector<8x128xf32>
    %c0_62 = arith.constant 0 : index
    %c0_63 = arith.constant 0 : index
    %169 = vector.load %arg9[%c0_62, %c0_63] : memref<128x160xf32, #tpu.memory_space<vmem>>, vector<128x160xf32>
    %cst_64 = arith.constant dense<0.000000e+00> : vector<8x160xf32>
    %170 = tpu.matmul %168, %169, %cst_64 {dimension_numbers = #tpu.dot_dimension_numbers<[1], [0], [0], [1], [0, 0, 1, 1], [], []>} : vector<8x128xf32>, vector<128x160xf32>, vector<8x160xf32> -> vector<8x160xf32>
    %c0_65 = arith.constant 0 : index
    %c0_66 = arith.constant 0 : index
    %171 = vector.load %arg10[%c0_65, %c0_66] : memref<1x160xf32, #tpu.memory_space<vmem>>, vector<1x160xf32>
    %172 = vector.broadcast %171 : vector<1x160xf32> to vector<8x160xf32>
    %173 = arith.addf %170, %172 : vector<8x160xf32>
    %174 = vector.extract_strided_slice %173 {offsets = [0, 0], sizes = [8, 32], strides = [1, 1]} : vector<8x160xf32> to vector<8x32xf32>
    %175 = arith.negf %174 : vector<8x32xf32>
    %176 = math.exp %175 : vector<8x32xf32>
    %cst_67 = arith.constant 1.000000e+00 : f32
    %177 = vector.broadcast %cst_67 : f32 to vector<8x32xf32>
    %178 = arith.addf %177, %176 : vector<8x32xf32>
    %179 = arith.divf %177, %178 : vector<8x32xf32>
    %180 = vector.extract_strided_slice %173 {offsets = [0, 32], sizes = [8, 32], strides = [1, 1]} : vector<8x160xf32> to vector<8x32xf32>
    %181 = arith.negf %180 : vector<8x32xf32>
    %182 = math.exp %181 : vector<8x32xf32>
    %cst_68 = arith.constant 1.000000e+00 : f32
    %183 = vector.broadcast %cst_68 : f32 to vector<8x32xf32>
    %184 = arith.addf %183, %182 : vector<8x32xf32>
    %185 = arith.divf %183, %184 : vector<8x32xf32>
    %186 = vector.extract_strided_slice %173 {offsets = [0, 64], sizes = [8, 32], strides = [1, 1]} : vector<8x160xf32> to vector<8x32xf32>
    %187 = arith.negf %186 : vector<8x32xf32>
    %188 = math.exp %187 : vector<8x32xf32>
    %cst_69 = arith.constant 1.000000e+00 : f32
    %189 = vector.broadcast %cst_69 : f32 to vector<8x32xf32>
    %190 = arith.addf %189, %188 : vector<8x32xf32>
    %191 = arith.divf %189, %190 : vector<8x32xf32>
    %192 = vector.extract_strided_slice %173 {offsets = [0, 96], sizes = [8, 32], strides = [1, 1]} : vector<8x160xf32> to vector<8x32xf32>
    %193 = math.tanh %192 : vector<8x32xf32>
    %194 = vector.extract_strided_slice %173 {offsets = [0, 128], sizes = [8, 32], strides = [1, 1]} : vector<8x160xf32> to vector<8x32xf32>
    %195 = arith.negf %194 : vector<8x32xf32>
    %196 = math.exp %195 : vector<8x32xf32>
    %cst_70 = arith.constant 1.000000e+00 : f32
    %197 = vector.broadcast %cst_70 : f32 to vector<8x32xf32>
    %198 = arith.addf %197, %196 : vector<8x32xf32>
    %199 = arith.divf %197, %198 : vector<8x32xf32>
    %200 = arith.mulf %185, %165 : vector<8x32xf32>
    %201 = arith.mulf %191, %167 : vector<8x32xf32>
    %202 = arith.addf %200, %201 : vector<8x32xf32>
    %203 = arith.mulf %179, %193 : vector<8x32xf32>
    %204 = arith.addf %202, %203 : vector<8x32xf32>
    %205 = math.tanh %204 : vector<8x32xf32>
    %206 = arith.mulf %199, %205 : vector<8x32xf32>
    %207 = tpu.concatenate %206, %204 in 1 : vector<8x32xf32>, vector<8x32xf32> -> vector<8x64xf32>
    %c1_i32 = arith.constant 1 : i32
    %208 = vector.broadcast %c1_i32 : i32 to vector<8x1xi32>
    %209 = arith.cmpi eq, %5, %208 : vector<8x1xi32>
    %210 = vector.shape_cast %209 : vector<8x1xi1> to vector<8x1xi1>
    %211 = vector.broadcast %210 : vector<8x1xi1> to vector<8x64xi1>
    %212 = arith.select %211, %207, %19 : vector<8x64xi1>, vector<8x64xf32>
    %213 = vector.shape_cast %9 : vector<8x1xi32> to vector<1x8x1xi32>
    %214 = vector.broadcast %213 : vector<1x8x1xi32> to vector<10x8x64xi32>
    %215 = arith.cmpi eq, %13, %214 : vector<10x8x64xi32>
    %c2_i32 = arith.constant 2 : i32
    %216 = vector.broadcast %c2_i32 : i32 to vector<8x1xi32>
    %217 = arith.cmpi ne, %5, %216 : vector<8x1xi32>
    %218 = vector.shape_cast %217 : vector<8x1xi1> to vector<1x8x1xi1>
    %219 = vector.broadcast %218 : vector<1x8x1xi1> to vector<10x8x64xi1>
    %220 = arith.andi %215, %219 : vector<10x8x64xi1>
    %221 = vector.shape_cast %212 : vector<8x64xf32> to vector<1x8x64xf32>
    %222 = vector.broadcast %221 : vector<1x8x64xf32> to vector<10x8x64xf32>
    %223 = arith.select %220, %222, %11 : vector<10x8x64xi1>, vector<10x8x64xf32>
    %c0_71 = arith.constant 0 : index
    %c0_72 = arith.constant 0 : index
    %c0_73 = arith.constant 0 : index
    %224 = vector.load %arg13[%c0_71, %c0_72, %c0_73] : memref<10x8x64xf32, #tpu.memory_space<vmem>>, vector<10x8x64xf32>
    tpu.vector_store %arg13[%c0_71, %c0_72, %c0_73], %223 {strides = array<i32>} : memref<10x8x64xf32, #tpu.memory_space<vmem>>, vector<10x8x64xf32>,
    %c6_i32 = arith.constant 6 : i32
    %225 = arith.cmpi eq, %arg0, %c6_i32 : i32
    %226 = arith.extui %225 : i1 to i32
    %c0_i32_74 = arith.constant 0 : i32
    %227 = arith.cmpi ne, %226, %c0_i32_74 : i32
    scf.if %227 {
      %228 = vector.extract_strided_slice %4 {offsets = [0, 5], sizes = [8, 1], strides = [1, 1]} : vector<8x8xi32> to vector<8x1xi32>
      %229 = vector.shape_cast %228 : vector<8x1xi32> to vector<1x8x1xi32>
      %230 = vector.broadcast %229 : vector<1x8x1xi32> to vector<10x8x64xi32>
      %231 = arith.cmpi eq, %13, %230 : vector<10x8x64xi32>
      %cst_75 = arith.constant 0.000000e+00 : f32
      %232 = vector.broadcast %cst_75 : f32 to vector<10x8x64xf32>
      %233 = arith.select %231, %223, %232 : vector<10x8x64xi1>, vector<10x8x64xf32>
      %cst_76 = arith.constant dense<0.000000e+00> : vector<8x64xf32>
      %234 = vector.multi_reduction <add>, %233, %cst_76 [0] : vector<10x8x64xf32> to vector<8x64xf32>
      %c0_77 = arith.constant 0 : index
      %c0_78 = arith.constant 0 : index
      %235 = vector.load %arg12[%c0_77, %c0_78] : memref<8x64xf32, #tpu.memory_space<vmem>>, vector<8x64xf32>
      tpu.vector_store %arg12[%c0_77, %c0_78], %234 {strides = array<i32>} : memref<8x64xf32, #tpu.memory_space<vmem>>, vector<8x64xf32>,
    } else {
    }
    return
  }
  func.func @transform_0(%arg0: i32) -> (i32, i32, i32) {
    %c0_i32 = arith.constant 0 : i32
    %c0_i32_0 = arith.constant 0 : i32
    %c0_i32_1 = arith.constant 0 : i32
    return %arg0, %c0_i32, %c0_i32_0 : i32, i32, i32
  }
  func.func @transform_1(%arg0: i32) -> (i32, i32, i32) {
    %c0_i32 = arith.constant 0 : i32
    %c0_i32_0 = arith.constant 0 : i32
    %c0_i32_1 = arith.constant 0 : i32
    %c0_i32_2 = arith.constant 0 : i32
    return %c0_i32, %c0_i32_0, %c0_i32_1 : i32, i32, i32
  }
  func.func @transform_2(%arg0: i32) -> (i32, i32) {
    %c0_i32 = arith.constant 0 : i32
    %c0_i32_0 = arith.constant 0 : i32
    %c0_i32_1 = arith.constant 0 : i32
    return %c0_i32, %c0_i32_0 : i32, i32
  }
  func.func @transform_3(%arg0: i32) -> (i32, i32) {
    %c0_i32 = arith.constant 0 : i32
    %c0_i32_0 = arith.constant 0 : i32
    %c0_i32_1 = arith.constant 0 : i32
    return %c0_i32, %c0_i32_0 : i32, i32
  }
  func.func @transform_4(%arg0: i32) -> (i32, i32) {
    %c0_i32 = arith.constant 0 : i32
    %c0_i32_0 = arith.constant 0 : i32
    %c0_i32_1 = arith.constant 0 : i32
    return %c0_i32, %c0_i32_0 : i32, i32
  }
  func.func @transform_5(%arg0: i32) -> (i32, i32) {
    %c0_i32 = arith.constant 0 : i32
    %c0_i32_0 = arith.constant 0 : i32
    %c0_i32_1 = arith.constant 0 : i32
    return %c0_i32, %c0_i32_0 : i32, i32
  }
  func.func @transform_6(%arg0: i32) -> (i32, i32) {
    %c0_i32 = arith.constant 0 : i32
    %c0_i32_0 = arith.constant 0 : i32
    %c0_i32_1 = arith.constant 0 : i32
    return %c0_i32, %c0_i32_0 : i32, i32
  }
  func.func @transform_7(%arg0: i32) -> (i32, i32) {
    %c0_i32 = arith.constant 0 : i32
    %c0_i32_0 = arith.constant 0 : i32
    %c0_i32_1 = arith.constant 0 : i32
    return %c0_i32, %c0_i32_0 : i32, i32
  }
  func.func @transform_8(%arg0: i32) -> (i32, i32) {
    %c0_i32 = arith.constant 0 : i32
    %c0_i32_0 = arith.constant 0 : i32
    %c0_i32_1 = arith.constant 0 : i32
    return %c0_i32, %c0_i32_0 : i32, i32
  }
  func.func @transform_9(%arg0: i32) -> (i32, i32) {
    %c0_i32 = arith.constant 0 : i32
    %c0_i32_0 = arith.constant 0 : i32
    %c0_i32_1 = arith.constant 0 : i32
    return %c0_i32, %c0_i32_0 : i32, i32
  }
  func.func @transform_10(%arg0: i32) -> (i32, i32, i32) {
    %c0_i32 = arith.constant 0 : i32
    %c0_i32_0 = arith.constant 0 : i32
    %c0_i32_1 = arith.constant 0 : i32
    return %arg0, %c0_i32, %c0_i32_0 : i32, i32, i32
  }
  func.func @transform_11(%arg0: i32) -> (i32, i32) {
    %c0_i32 = arith.constant 0 : i32
    %c0_i32_0 = arith.constant 0 : i32
    %c0_i32_1 = arith.constant 0 : i32
    return %c0_i32, %c0_i32_0 : i32, i32
  }
}

</mosaic_0001>

<llo_original>
// kernel: _spinn_run.1
$region0: #{_spinn_run.1}
  #allocation0 [shape = 'u32[]', space=smem, size = 0x4, offset = 0x4, fixed_abs, tag = 'smem constant byte address 0x4 - core index']
  #allocation1 [shape = 'u32[72,128]{1,0:T(1,128)}', space=vmem, size = 0x9000, scoped, tag = 'internal scratch']
  #allocation2 [shape = 'f32[10,8,64]{2,1,0:T(8,128)}', space=vmem, size = 0xa000, scoped, tag = 'scratch operand']
  #allocation3 [shape = 'f32[8,64]{1,0:T(8,128)}', space=vmem, size = 0x1000, scoped, tag = 'scratch operand']
  %s0 = inlined_call_operand.vmem [shape: s32[7,8,8], index: 0, kind: input, shape index: {}]
  %s1 = inlined_call_operand.vmem [shape: f32[9,8,64], index: 1, kind: input, shape index: {}]
  %s2 = inlined_call_operand.vmem [shape: f32[3,32], index: 2, kind: input, shape index: {}]
  %s3 = inlined_call_operand.vmem [shape: f32[3,32], index: 3, kind: input, shape index: {}]
  %s4 = inlined_call_operand.vmem [shape: f32[128,128], index: 4, kind: input, shape index: {}]
  %s5 = inlined_call_operand.vmem [shape: f32[1,128], index: 5, kind: input, shape index: {}]
  %s6 = inlined_call_operand.vmem [shape: f32[64,128], index: 6, kind: input, shape index: {}]
  %s7 = inlined_call_operand.vmem [shape: f32[1,128], index: 7, kind: input, shape index: {}]
  %s8 = inlined_call_operand.vmem [shape: f32[128,160], index: 8, kind: input, shape index: {}]
  %s9 = inlined_call_operand.vmem [shape: f32[1,160], index: 9, kind: input, shape index: {}]
  %s10 = inlined_call_operand.hbm [shape: f32[7,8,128], index: 10, kind: output, shape index: {0}]
  %s11 = inlined_call_operand.hbm [shape: f32[8,64], index: 11, kind: output, shape index: {1}]
  %12 = xla_tuple %s10, %s11
  %s13 = sld [smem:[#allocation0]]
  $region89: #{_spinn_run.1} parent=0
    _
  %s15 = ssub.s32 1, %s13
  %s16 = scalar_select 0, %s15, %s13
  $region1: #{_spinn_run.1} parent=0
    #allocation4 [shape = 'u8[8192]{0}', space=vmem, size = 0x2000, scoped, tag = 'output window, operand 0']
    #allocation5 [shape = 's32[2]{0}', space=sflag, size = 0x8, scoped, tag = 'scoped memory for _spinn_run.1']
    #allocation6 [shape = 'u8[4096]{0}', space=vmem, size = 0x1000, scoped, tag = 'output window, operand 1, single buffered']
    #allocation7 [shape = 's32[1]{0}', space=sflag, size = 0x4, scoped, tag = 'scoped memory for _spinn_run.1']
    %17 = vsyncpa [#allocation5], 0
    %s18 = scalar_lea.sflag [#allocation5], 1
    %19 = vsyncpa %s18, 0
    %20 = vsyncpa [#allocation7], 0
    loop: start=0, step=1, limit=9
    $region2: #{_spinn_run.1} parent=1 // loop_pre_header
      _
    $region3: #{_spinn_run.1} parent=1 // loop_header
      %s22 = sphi 0, %s26
      %p23 = scmp.ge.s32.totalorder %s22, 9
      %s32 = sphi 0, %s34
      %s35 = sphi 0, %s32
      %s36 = sphi 0, %s35
      %s52 = sphi 0, %s36
      %s56 = sphi 0, %s56
      %s58 = sphi 0, %s56
      %s59 = sphi 0, %s58
      %s73 = sphi 0, %s59
      %s77 = sphi 0, %s77
      %s79 = sphi 0, %s77
      %s80 = sphi 0, %s79
      %s94 = sphi 0, %s80
      %s98 = sphi 0, %s98
      %s100 = sphi 0, %s98
      %s101 = sphi 0, %s100
      %s115 = sphi 0, %s101
      %s119 = sphi 0, %s119
      %s121 = sphi 0, %s119
      %s122 = sphi 0, %s121
      %s136 = sphi 0, %s122
      %s140 = sphi 0, %s140
      %s142 = sphi 0, %s140
      %s143 = sphi 0, %s142
      %s157 = sphi 0, %s143
      %s161 = sphi 0, %s161
      %s163 = sphi 0, %s161
      %s164 = sphi 0, %s163
      %s178 = sphi 0, %s164
      %s182 = sphi 0, %s182
      %s184 = sphi 0, %s182
      %s185 = sphi 0, %s184
      %s199 = sphi 0, %s185
      %s203 = sphi 0, %s203
      %s205 = sphi 0, %s203
      %s206 = sphi 0, %s205
      %s220 = sphi 0, %s206
      %s224 = sphi 0, %s224
      %s226 = sphi 0, %s224
      %s227 = sphi 0, %s226
      %s241 = sphi 0, %s227
      %s247 = sphi 0, %s249
      %s250 = sphi 0, %s247
      %s251 = sphi 0, %s250
      %s267 = sphi 0, %s251
      %s271 = sphi 0, %s271
      %s273 = sphi 0, %s271
      %s274 = sphi 0, %s273
      %s288 = sphi 0, %s274
    $region4: #{_spinn_run.1} parent=1 // loop_header_branch
      %25 = sbr.rel (%p23) target = $region8
    $region5: #{_spinn_run.1} parent=1 // loop_body
      %s27 = ssub.s32 %s22, 1
      %s28 = ssub.s32 %s22, 2
      %s29 = sadd.s32 %s22, 1
      %s30 = ssub.s32 %s22, %s29
      %p31 = scmp.eq.s32.totalorder %s30, 0
      %s33 = sadd.s32 %s32, 1
      %s34 = scalar_select %p31, %s32, %s33
      %p37 = pneg %p31
      %p38 = scmp.eq.s32.totalorder %s22, 6
      %p39 = por %p37, %p38
      %p40 = scmp.ne.s32.totalorder %s32, %s35
      %p41 = scmp.eq.s32.totalorder %s22, 0
      %p42 = por %p40, %p41
      %p43 = scmp.ne.s32.totalorder %s32, %s35
      %p44 = scmp.eq.s32.totalorder %s27, 6
      %p45 = por %p43, %p44
      %p46 = scmp.ne.s32.totalorder %s35, %s36
      %p47 = scmp.eq.s32.totalorder %s27, 0
      %p48 = por %p46, %p47
      %p49 = scmp.ne.s32.totalorder %s35, %s36
      %p50 = scmp.eq.s32.totalorder %s28, 6
      %p51 = por %p49, %p50
      %p53 = scmp.ne.s32.totalorder %s36, %s52
      %p54 = scmp.eq.s32.totalorder %s28, 0
      %p55 = por %p53, %p54
      %s57 = sadd.s32 %s56, 1
      %p60 = scmp.eq.s32.totalorder %s22, 6
      %p61 = scmp.ne.s32.totalorder %s56, %s58
      %p62 = scmp.eq.s32.totalorder %s22, 0
      %p63 = por %p61, %p62
      %p64 = scmp.ne.s32.totalorder %s56, %s58
      %p65 = scmp.eq.s32.totalorder %s27, 6
      %p66 = por %p64, %p65
      %p67 = scmp.ne.s32.totalorder %s58, %s59
      %p68 = scmp.eq.s32.totalorder %s27, 0
      %p69 = por %p67, %p68
      %p70 = scmp.ne.s32.totalorder %s58, %s59
      %p71 = scmp.eq.s32.totalorder %s28, 6
      %p72 = por %p70, %p71
      %p74 = scmp.ne.s32.totalorder %s59, %s73
      %p75 = scmp.eq.s32.totalorder %s28, 0
      %p76 = por %p74, %p75
      %s78 = sadd.s32 %s77, 1
      %p81 = scmp.eq.s32.totalorder %s22, 6
      %p82 = scmp.ne.s32.totalorder %s77, %s79
      %p83 = scmp.eq.s32.totalorder %s22, 0
      %p84 = por %p82, %p83
      %p85 = scmp.ne.s32.totalorder %s77, %s79
      %p86 = scmp.eq.s32.totalorder %s27, 6
      %p87 = por %p85, %p86
      %p88 = scmp.ne.s32.totalorder %s79, %s80
      %p89 = scmp.eq.s32.totalorder %s27, 0
      %p90 = por %p88, %p89
      %p91 = scmp.ne.s32.totalorder %s79, %s80
      %p92 = scmp.eq.s32.totalorder %s28, 6
      %p93 = por %p91, %p92
      %p95 = scmp.ne.s32.totalorder %s80, %s94
      %p96 = scmp.eq.s32.totalorder %s28, 0
      %p97 = por %p95, %p96
      %s99 = sadd.s32 %s98, 1
      %p102 = scmp.eq.s32.totalorder %s22, 6
      %p103 = scmp.ne.s32.totalorder %s98, %s100
      %p104 = scmp.eq.s32.totalorder %s22, 0
      %p105 = por %p103, %p104
      %p106 = scmp.ne.s32.totalorder %s98, %s100
      %p107 = scmp.eq.s32.totalorder %s27, 6
      %p108 = por %p106, %p107
      %p109 = scmp.ne.s32.totalorder %s100, %s101
      %p110 = scmp.eq.s32.totalorder %s27, 0
      %p111 = por %p109, %p110
      %p112 = scmp.ne.s32.totalorder %s100, %s101
      %p113 = scmp.eq.s32.totalorder %s28, 6
      %p114 = por %p112, %p113
      %p116 = scmp.ne.s32.totalorder %s101, %s115
      %p117 = scmp.eq.s32.totalorder %s28, 0
      %p118 = por %p116, %p117
      %s120 = sadd.s32 %s119, 1
      %p123 = scmp.eq.s32.totalorder %s22, 6
      %p124 = scmp.ne.s32.totalorder %s119, %s121
      %p125 = scmp.eq.s32.totalorder %s22, 0
      %p126 = por %p124, %p125
      %p127 = scmp.ne.s32.totalorder %s119, %s121
      %p128 = scmp.eq.s32.totalorder %s27, 6
      %p129 = por %p127, %p128
      %p130 = scmp.ne.s32.totalorder %s121, %s122
      %p131 = scmp.eq.s32.totalorder %s27, 0
      %p132 = por %p130, %p131
      %p133 = scmp.ne.s32.totalorder %s121, %s122
      %p134 = scmp.eq.s32.totalorder %s28, 6
      %p135 = por %p133, %p134
      %p137 = scmp.ne.s32.totalorder %s122, %s136
      %p138 = scmp.eq.s32.totalorder %s28, 0
      %p139 = por %p137, %p138
      %s141 = sadd.s32 %s140, 1
      %p144 = scmp.eq.s32.totalorder %s22, 6
      %p145 = scmp.ne.s32.totalorder %s140, %s142
      %p146 = scmp.eq.s32.totalorder %s22, 0
      %p147 = por %p145, %p146
      %p148 = scmp.ne.s32.totalorder %s140, %s142
      %p149 = scmp.eq.s32.totalorder %s27, 6
      %p150 = por %p148, %p149
      %p151 = scmp.ne.s32.totalorder %s142, %s143
      %p152 = scmp.eq.s32.totalorder %s27, 0
      %p153 = por %p151, %p152
      %p154 = scmp.ne.s32.totalorder %s142, %s143
      %p155 = scmp.eq.s32.totalorder %s28, 6
      %p156 = por %p154, %p155
      %p158 = scmp.ne.s32.totalorder %s143, %s157
      %p159 = scmp.eq.s32.totalorder %s28, 0
      %p160 = por %p158, %p159
      %s162 = sadd.s32 %s161, 1
      %p165 = scmp.eq.s32.totalorder %s22, 6
      %p166 = scmp.ne.s32.totalorder %s161, %s163
      %p167 = scmp.eq.s32.totalorder %s22, 0
      %p168 = por %p166, %p167
      %p169 = scmp.ne.s32.totalorder %s161, %s163
      %p170 = scmp.eq.s32.totalorder %s27, 6
      %p171 = por %p169, %p170
      %p172 = scmp.ne.s32.totalorder %s163, %s164
      %p173 = scmp.eq.s32.totalorder %s27, 0
      %p174 = por %p172, %p173
      %p175 = scmp.ne.s32.totalorder %s163, %s164
      %p176 = scmp.eq.s32.totalorder %s28, 6
      %p177 = por %p175, %p176
      %p179 = scmp.ne.s32.totalorder %s164, %s178
      %p180 = scmp.eq.s32.totalorder %s28, 0
      %p181 = por %p179, %p180
      %s183 = sadd.s32 %s182, 1
      %p186 = scmp.eq.s32.totalorder %s22, 6
      %p187 = scmp.ne.s32.totalorder %s182, %s184
      %p188 = scmp.eq.s32.totalorder %s22, 0
      %p189 = por %p187, %p188
      %p190 = scmp.ne.s32.totalorder %s182, %s184
      %p191 = scmp.eq.s32.totalorder %s27, 6
      %p192 = por %p190, %p191
      %p193 = scmp.ne.s32.totalorder %s184, %s185
      %p194 = scmp.eq.s32.totalorder %s27, 0
      %p195 = por %p193, %p194
      %p196 = scmp.ne.s32.totalorder %s184, %s185
      %p197 = scmp.eq.s32.totalorder %s28, 6
      %p198 = por %p196, %p197
      %p200 = scmp.ne.s32.totalorder %s185, %s199
      %p201 = scmp.eq.s32.totalorder %s28, 0
      %p202 = por %p200, %p201
      %s204 = sadd.s32 %s203, 1
      %p207 = scmp.eq.s32.totalorder %s22, 6
      %p208 = scmp.ne.s32.totalorder %s203, %s205
      %p209 = scmp.eq.s32.totalorder %s22, 0
      %p210 = por %p208, %p209
      %p211 = scmp.ne.s32.totalorder %s203, %s205
      %p212 = scmp.eq.s32.totalorder %s27, 6
      %p213 = por %p211, %p212
      %p214 = scmp.ne.s32.totalorder %s205, %s206
      %p215 = scmp.eq.s32.totalorder %s27, 0
      %p216 = por %p214, %p215
      %p217 = scmp.ne.s32.totalorder %s205, %s206
      %p218 = scmp.eq.s32.totalorder %s28, 6
      %p219 = por %p217, %p218
      %p221 = scmp.ne.s32.totalorder %s206, %s220
      %p222 = scmp.eq.s32.totalorder %s28, 0
      %p223 = por %p221, %p222
      %s225 = sadd.s32 %s224, 1
      %p228 = scmp.eq.s32.totalorder %s22, 6
      %p229 = scmp.ne.s32.totalorder %s224, %s226
      %p230 = scmp.eq.s32.totalorder %s22, 0
      %p231 = por %p229, %p230
      %p232 = scmp.ne.s32.totalorder %s224, %s226
      %p233 = scmp.eq.s32.totalorder %s27, 6
      %p234 = por %p232, %p233
      %p235 = scmp.ne.s32.totalorder %s226, %s227
      %p236 = scmp.eq.s32.totalorder %s27, 0
      %p237 = por %p235, %p236
      %p238 = scmp.ne.s32.totalorder %s226, %s227
      %p239 = scmp.eq.s32.totalorder %s28, 6
      %p240 = por %p238, %p239
      %p242 = scmp.ne.s32.totalorder %s227, %s241
      %p243 = scmp.eq.s32.totalorder %s28, 0
      %p244 = por %p242, %p243
      %s245 = ssub.s32 %s22, %s29
      %p246 = scmp.eq.s32.totalorder %s245, 0
      %s248 = sadd.s32 %s247, 1
      %s249 = scalar_select %p246, %s247, %s248
      %p252 = pneg %p246
      %p253 = scmp.eq.s32.totalorder %s22, 6
      %p254 = por %p252, %p253
      %p255 = scmp.ne.s32.totalorder %s247, %s250
      %p256 = scmp.eq.s32.totalorder %s22, 0
      %p257 = por %p255, %p256
      %p258 = scmp.ne.s32.totalorder %s247, %s250
      %p259 = scmp.eq.s32.totalorder %s27, 6
      %p260 = por %p258, %p259
      %p261 = scmp.ne.s32.totalorder %s250, %s251
      %p262 = scmp.eq.s32.totalorder %s27, 0
      %p263 = por %p261, %p262
      %p264 = scmp.ne.s32.totalorder %s250, %s251
      %p265 = scmp.eq.s32.totalorder %s28, 6
      %p266 = por %p264, %p265
      %p268 = scmp.ne.s32.totalorder %s251, %s267
      %p269 = scmp.eq.s32.totalorder %s28, 0
      %p270 = por %p268, %p269
      %s272 = sadd.s32 %s271, 1
      %p275 = scmp.eq.s32.totalorder %s22, 6
      %p276 = scmp.ne.s32.totalorder %s271, %s273
      %p277 = scmp.eq.s32.totalorder %s22, 0
      %p278 = por %p276, %p277
      %p279 = scmp.ne.s32.totalorder %s271, %s273
      %p280 = scmp.eq.s32.totalorder %s27, 6
      %p281 = por %p279, %p280
      %p282 = scmp.ne.s32.totalorder %s273, %s274
      %p283 = scmp.eq.s32.totalorder %s27, 0
      %p284 = por %p282, %p283
      %p285 = scmp.ne.s32.totalorder %s273, %s274
      %p286 = scmp.eq.s32.totalorder %s28, 6
      %p287 = por %p285, %p286
      %p289 = scmp.ne.s32.totalorder %s274, %s288
      %p290 = scmp.eq.s32.totalorder %s28, 0
      %p291 = por %p289, %p290
      %p292 = scmp.le.s32.totalorder 1, %s22
      %p293 = scmp.lt.s32.totalorder %s22, 8
      %p294 = pnand %p292, %p293
      %p295 = pneg %p294
      // Predicated region
      $region9: #{_spinn_run.1} parent=5 // pred_check
        _
      $region10: #{_spinn_run.1} parent=5 // pred_check_branch
        %297 = sbr.rel (%p294) target = $region12
      $region11: #{_spinn_run.1} parent=5 // pred_region
        %s298 = ssub.s32 %s22, 1
        // Predicated region
        $region13: #{_spinn_run.1} parent=11 // pred_check
          %p299 = pneg %p69
        $region14: #{_spinn_run.1} parent=11 // pred_check_branch
          %301 = sbr.rel (%p299) target = $region16
        $region15: #{_spinn_run.1} parent=11 // pred_region
          _
        $region16: #{_spinn_run.1} parent=11 // pred_fallthru
          _
        // Predicated region
        $region17: #{_spinn_run.1} parent=11 // pred_check
          %p302 = pneg %p90
        $region18: #{_spinn_run.1} parent=11 // pred_check_branch
          %304 = sbr.rel (%p302) target = $region20
        $region19: #{_spinn_run.1} parent=11 // pred_region
          _
        $region20: #{_spinn_run.1} parent=11 // pred_fallthru
          _
        // Predicated region
        $region21: #{_spinn_run.1} parent=11 // pred_check
          %p305 = pneg %p111
        $region22: #{_spinn_run.1} parent=11 // pred_check_branch
          %307 = sbr.rel (%p305) target = $region24
        $region23: #{_spinn_run.1} parent=11 // pred_region
          _
        $region24: #{_spinn_run.1} parent=11 // pred_fallthru
          _
        // Predicated region
        $region25: #{_spinn_run.1} parent=11 // pred_check
          %p308 = pneg %p132
        $region26: #{_spinn_run.1} parent=11 // pred_check_branch
          %310 = sbr.rel (%p308) target = $region28
        $region27: #{_spinn_run.1} parent=11 // pred_region
          _
        $region28: #{_spinn_run.1} parent=11 // pred_fallthru
          _
        // Predicated region
        $region29: #{_spinn_run.1} parent=11 // pred_check
          %p311 = pneg %p153
        $region30: #{_spinn_run.1} parent=11 // pred_check_branch
          %313 = sbr.rel (%p311) target = $region32
        $region31: #{_spinn_run.1} parent=11 // pred_region
          _
        $region32: #{_spinn_run.1} parent=11 // pred_fallthru
          _
        // Predicated region
        $region33: #{_spinn_run.1} parent=11 // pred_check
          %p314 = pneg %p174
        $region34: #{_spinn_run.1} parent=11 // pred_check_branch
          %316 = sbr.rel (%p314) target = $region36
        $region35: #{_spinn_run.1} parent=11 // pred_region
          _
        $region36: #{_spinn_run.1} parent=11 // pred_fallthru
          _
        // Predicated region
        $region37: #{_spinn_run.1} parent=11 // pred_check
          %p317 = pneg %p195
        $region38: #{_spinn_run.1} parent=11 // pred_check_branch
          %319 = sbr.rel (%p317) target = $region40
        $region39: #{_spinn_run.1} parent=11 // pred_region
          _
        $region40: #{_spinn_run.1} parent=11 // pred_fallthru
          _
        // Predicated region
        $region41: #{_spinn_run.1} parent=11 // pred_check
          %p320 = pneg %p216
        $region42: #{_spinn_run.1} parent=11 // pred_check_branch
          %322 = sbr.rel (%p320) target = $region44
        $region43: #{_spinn_run.1} parent=11 // pred_region
          _
        $region44: #{_spinn_run.1} parent=11 // pred_fallthru
          _
        // Predicated region
        $region45: #{_spinn_run.1} parent=11 // pred_check
          %p323 = pneg %p237
        $region46: #{_spinn_run.1} parent=11 // pred_check_branch
          %325 = sbr.rel (%p323) target = $region48
        $region47: #{_spinn_run.1} parent=11 // pred_region
          _
        $region48: #{_spinn_run.1} parent=11 // pred_fallthru
          _
      $region12: #{_spinn_run.1} parent=5 // pred_fallthru
        _
      %p326 = scmp.lt.s32.totalorder %s22, 7
      // Predicated region
      $region49: #{_spinn_run.1} parent=5 // pred_check
        %p327 = pneg %p326
      $region50: #{_spinn_run.1} parent=5 // pred_check_branch
        %329 = sbr.rel (%p327) target = $region52
      $region51: #{_spinn_run.1} parent=5 // pred_region
        // Predicated region
        $region53: #{_spinn_run.1} parent=51 // pred_check
          %p330 = pneg %p42
        $region54: #{_spinn_run.1} parent=51 // pred_check_branch
          %332 = sbr.rel (%p330) target = $region56
        $region55: #{_spinn_run.1} parent=51 // pred_region
          %p333 = scmp.lt.s32.totalorder %s22, 6
          %s334 = scalar_select %p333, %s22, 6
          %s335 = smul.addr %s334, 8
          %s336 = scalar_lea.vmem %s0, %s335
        $region56: #{_spinn_run.1} parent=51 // pred_fallthru
          _
      $region52: #{_spinn_run.1} parent=5 // pred_fallthru
        _
      %p337 = scmp.le.s32.totalorder 1, %s22
      %p338 = scmp.lt.s32.totalorder %s22, 8
      %p339 = pnand %p337, %p338
      %p340 = pneg %p339
      // Predicated region
      $region57: #{_spinn_run.1} parent=5 // pred_check
        _
      $region58: #{_spinn_run.1} parent=5 // pred_check_branch
        %342 = sbr.rel (%p339) target = $region60
      $region59: #{_spinn_run.1} parent=5 // pred_region
        %s343 = ssub.s32 %s22, 1
        %p344 = scmp.lt.s32.totalorder %s27, 6
        %s345 = scalar_select %p344, %s27, 6
        %s346 = smul.addr %s345, 8
        %s347 = scalar_lea.vmem %s0, %s346
        %p348 = pneg %p48
        %p349 = pneg %p45
        %p350 = pneg %p69
        %p351 = pneg %p66
        %p352 = pneg %p90
        %p353 = pneg %p87
        %p354 = pneg %p111
        %p355 = pneg %p108
        %p356 = pneg %p132
        %p357 = pneg %p129
        %p358 = pneg %p153
        %p359 = pneg %p150
        %p360 = pneg %p174
        %p361 = pneg %p171
        %p362 = pneg %p195
        %p363 = pneg %p192
        %p364 = pneg %p216
        %p365 = pneg %p213
        %p366 = pneg %p237
        %p367 = pneg %p234
        %p368 = pneg %p263
        %p369 = pneg %p260
        %s370 = sand.u32 %s250, 1
        %s371 = scalar_lea.sflag [#allocation5], %s370
        %s372 = sand.u32 %s250, 1
        %s373 = smul.addr %s372, 8
        %s374 = scalar_lea.vmem [#allocation4], %s373
        %p375 = pneg %p284
        %p376 = pneg %p281
        %p377 = scmp.lt.s32.totalorder %s27, 6
        %s378 = scalar_select %p377, %s27, 6
        %s379 = smul.addr %s378, 8
        %s380 = scalar_lea.vmem %s0, %s379
        %p381 = scmp.eq.s32.totalorder %s27, 0
        // Predicated region
        $region61: #{_spinn_run.1} parent=59 // pred_check
          %p382 = pneg %p381
        $region62: #{_spinn_run.1} parent=59 // pred_check_branch
          %384 = sbr.rel (%p382) target = $region64
        $region63: #{_spinn_run.1} parent=59 // pred_region
          %vm385 = vcmask 523264
          %386 = vst.msk [vmem:[#allocation2] sm:$0xff] %vm385, 0.0
          %387 = vst.msk [vmem:[#allocation2 + $0x8] sm:$0xff] %vm385, 0.0
          %388 = vst.msk [vmem:[#allocation2 + $0x10] sm:$0xff] %vm385, 0.0
          %389 = vst.msk [vmem:[#allocation2 + $0x18] sm:$0xff] %vm385, 0.0
          %390 = vst.msk [vmem:[#allocation2 + $0x20] sm:$0xff] %vm385, 0.0
          %391 = vst.msk [vmem:[#allocation2 + $0x28] sm:$0xff] %vm385, 0.0
          %392 = vst.msk [vmem:[#allocation2 + $0x30] sm:$0xff] %vm385, 0.0
          %393 = vst.msk [vmem:[#allocation2 + $0x38] sm:$0xff] %vm385, 0.0
          %394 = vst.msk [vmem:[#allocation2 + $0x40] sm:$0xff] %vm385, 0.0
          %395 = vst.msk [vmem:[#allocation2 + $0x48] sm:$0xff] %vm385, 0.0
          %396 = vst.msk [vmem:[#allocation3] sm:$0xff] %vm385, 0.0
        $region64: #{_spinn_run.1} parent=59 // pred_fallthru
          _
        %v397 = vld [vmem:[%s380] sm:$0xff]
        %v398 = vld [vmem:[%s1] sm:$0xff]
        %v399 = vld [vmem:[%s1 + $0x8] sm:$0xff]
        %v400 = vld [vmem:[%s1 + $0x10] sm:$0xff]
        %v401 = vld [vmem:[%s1 + $0x18] sm:$0xff]
        %v402 = vld [vmem:[%s1 + $0x20] sm:$0xff]
        %v403 = vld [vmem:[%s1 + $0x28] sm:$0xff]
        %v404 = vld [vmem:[%s1 + $0x30] sm:$0xff]
        %v405 = vld [vmem:[%s1 + $0x38] sm:$0xff]
        %v406 = vld [vmem:[%s1 + $0x40] sm:$0xff]
        %v407 = vld [vmem:[#allocation2] sm:$0xff]
        %v408 = vld [vmem:[#allocation2 + $0x8] sm:$0xff]
        %v409 = vld [vmem:[#allocation2 + $0x10] sm:$0xff]
        %v410 = vld [vmem:[#allocation2 + $0x18] sm:$0xff]
        %v411 = vld [vmem:[#allocation2 + $0x20] sm:$0xff]
        %v412 = vld [vmem:[#allocation2 + $0x28] sm:$0xff]
        %v413 = vld [vmem:[#allocation2 + $0x30] sm:$0xff]
        %v414 = vld [vmem:[#allocation2 + $0x38] sm:$0xff]
        %v415 = vld [vmem:[#allocation2 + $0x40] sm:$0xff]
        %v416 = vld [vmem:[#allocation2 + $0x48] sm:$0xff]
        %417 = vset.pattern.permute.xlu0 1
        %418 = vperm.xlu0 %417, %v397
        %v419 = vpop.permute.xlu0 %418
        %vm420 = vcmp.eq.s32.totalorder %v419, 0
        %vm421 = vcmp.eq.s32.totalorder %v419, 1
        %vm422 = vcmp.eq.s32.totalorder %v419, 2
        %vm423 = vcmp.eq.s32.totalorder %v419, 3
        %vm424 = vcmp.eq.s32.totalorder %v419, 4
        %vm425 = vcmp.eq.s32.totalorder %v419, 5
        %vm426 = vcmp.eq.s32.totalorder %v419, 6
        %vm427 = vcmp.eq.s32.totalorder %v419, 7
        %vm428 = vcmp.eq.s32.totalorder %v419, 8
        %v429 = vsel %vm420, %v398, 0.0
        %v430 = vsel %vm421, %v399, 0.0
        %v431 = vsel %vm422, %v400, 0.0
        %v432 = vsel %vm423, %v401, 0.0
        %v433 = vsel %vm424, %v402, 0.0
        %v434 = vsel %vm425, %v403, 0.0
        %v435 = vsel %vm426, %v404, 0.0
        %v436 = vsel %vm427, %v405, 0.0
        %v437 = vsel %vm428, %v406, 0.0
        %vm438 = vcmask 523264
        %v439 = vsel %vm438, %v429, 0.0
        %v440 = vsel %vm438, %v430, 0.0
        %v441 = vadd.f32 %v439, %v440
        %v442 = vsel %vm438, %v431, 0.0
        %v443 = vadd.f32 %v441, %v442
        %v444 = vsel %vm438, %v432, 0.0
        %v445 = vadd.f32 %v443, %v444
        %v446 = vsel %vm438, %v433, 0.0
        %v447 = vadd.f32 %v445, %v446
        %v448 = vsel %vm438, %v434, 0.0
        %v449 = vadd.f32 %v447, %v448
        %v450 = vsel %vm438, %v435, 0.0
        %v451 = vadd.f32 %v449, %v450
        %v452 = vsel %vm438, %v436, 0.0
        %v453 = vadd.f32 %v451, %v452
        %v454 = vsel %vm438, %v437, 0.0
        %v455 = vadd.f32 %v453, %v454
        %456 = vset.pattern.permute.xlu0 2
        %457 = vperm.xlu0 %456, %v397
        %v458 = vpop.permute.xlu0 %457
        %vm459 = vcmp.eq.s32.totalorder %v458, 0
        %vm460 = vcmp.eq.s32.totalorder %v458, 1
        %vm461 = vcmp.eq.s32.totalorder %v458, 2
        %vm462 = vcmp.eq.s32.totalorder %v458, 3
        %vm463 = vcmp.eq.s32.totalorder %v458, 4
        %vm464 = vcmp.eq.s32.totalorder %v458, 5
        %vm465 = vcmp.eq.s32.totalorder %v458, 6
        %vm466 = vcmp.eq.s32.totalorder %v458, 7
        %vm467 = vcmp.eq.s32.totalorder %v458, 8
        %vm468 = vcmp.eq.s32.totalorder %v458, 9
        %v469 = vsel %vm459, %v407, 0.0
        %v470 = vsel %vm460, %v408, 0.0
        %v471 = vsel %vm461, %v409, 0.0
        %v472 = vsel %vm462, %v410, 0.0
        %v473 = vsel %vm463, %v411, 0.0
        %v474 = vsel %vm464, %v412, 0.0
        %v475 = vsel %vm465, %v413, 0.0
        %v476 = vsel %vm466, %v414, 0.0
        %v477 = vsel %vm467, %v415, 0.0
        %v478 = vsel %vm468, %v416, 0.0
        %v479 = vsel %vm438, %v469, 0.0
        %v480 = vsel %vm438, %v470, 0.0
        %v481 = vadd.f32 %v479, %v480
        %v482 = vsel %vm438, %v471, 0.0
        %v483 = vadd.f32 %v481, %v482
        %v484 = vsel %vm438, %v472, 0.0
        %v485 = vadd.f32 %v483, %v484
        %v486 = vsel %vm438, %v473, 0.0
        %v487 = vadd.f32 %v485, %v486
        %v488 = vsel %vm438, %v474, 0.0
        %v489 = vadd.f32 %v487, %v488
        %v490 = vsel %vm438, %v475, 0.0
        %v491 = vadd.f32 %v489, %v490
        %v492 = vsel %vm438, %v476, 0.0
        %v493 = vadd.f32 %v491, %v492
        %v494 = vsel %vm438, %v477, 0.0
        %v495 = vadd.f32 %v493, %v494
        %v496 = vsel %vm438, %v478, 0.0
        %v497 = vadd.f32 %v495, %v496
        %498 = vset.pattern.permute.xlu0 3
        %499 = vperm.xlu0 %498, %v397
        %v500 = vpop.permute.xlu0 %499
        %vm501 = vcmp.eq.s32.totalorder %v500, 0
        %vm502 = vcmp.eq.s32.totalorder %v500, 1
        %vm503 = vcmp.eq.s32.totalorder %v500, 2
        %vm504 = vcmp.eq.s32.totalorder %v500, 3
        %vm505 = vcmp.eq.s32.totalorder %v500, 4
        %vm506 = vcmp.eq.s32.totalorder %v500, 5
        %vm507 = vcmp.eq.s32.totalorder %v500, 6
        %vm508 = vcmp.eq.s32.totalorder %v500, 7
        %vm509 = vcmp.eq.s32.totalorder %v500, 8
        %vm510 = vcmp.eq.s32.totalorder %v500, 9
        %v511 = vsel %vm501, %v407, 0.0
        %v512 = vsel %vm502, %v408, 0.0
        %v513 = vsel %vm503, %v409, 0.0
        %v514 = vsel %vm504, %v410, 0.0
        %v515 = vsel %vm505, %v411, 0.0
        %v516 = vsel %vm506, %v412, 0.0
        %v517 = vsel %vm507, %v413, 0.0
        %v518 = vsel %vm508, %v414, 0.0
        %v519 = vsel %vm509, %v415, 0.0
        %v520 = vsel %vm510, %v416, 0.0
        %v521 = vsel %vm438, %v511, 0.0
        %v522 = vsel %vm438, %v512, 0.0
        %v523 = vadd.f32 %v521, %v522
        %v524 = vsel %vm438, %v513, 0.0
        %v525 = vadd.f32 %v523, %v524
        %v526 = vsel %vm438, %v514, 0.0
        %v527 = vadd.f32 %v525, %v526
        %v528 = vsel %vm438, %v515, 0.0
        %v529 = vadd.f32 %v527, %v528
        %v530 = vsel %vm438, %v516, 0.0
        %v531 = vadd.f32 %v529, %v530
        %v532 = vsel %vm438, %v517, 0.0
        %v533 = vadd.f32 %v531, %v532
        %v534 = vsel %vm438, %v518, 0.0
        %v535 = vadd.f32 %v533, %v534
        %v536 = vsel %vm438, %v519, 0.0
        %v537 = vadd.f32 %v535, %v536
        %v538 = vsel %vm438, %v520, 0.0
        %v539 = vadd.f32 %v537, %v538
        %v540 = vld [vmem:[#allocation3] sm:$0xff]
        %v541 = vld [vmem:[%s2] sm:$0x1]
        %v542 = vld [vmem:[%s3] sm:$0x1]
        %vm543 = vcmask 261120
        %v544 = vsel %vm543, %v455, 0.0
        %545 = vadd.xlane.f32.xlu0 %v544
        %v546 = vpop.xlane.xlu0 %545
        %v547 = vrcp.pop 32.0
        %v548 = vmul.f32 32.0, %v547
        %v549 = vsub.f32 1.0, %v548
        %v550 = vmul.f32 %v547, %v549
        %v551 = vadd.f32 %v547, %v550
        %vm552 = vweird.f32 %v547
        %v553 = vsel %vm552, %v547, %v551
        %v554 = vmul.f32 %v546, %v553
        %v555 = vsub.f32 %v455, %v554
        %v556 = vmul.f32 %v555, %v555
        %v557 = vsel %vm543, %v556, 0.0
        %558 = vadd.xlane.f32.xlu0 %v557
        %v559 = vpop.xlane.xlu0 %558
        %v560 = vrcp.pop 31.0
        %v561 = vmul.f32 31.0, %v560
        %v562 = vsub.f32 1.0, %v561
        %v563 = vmul.f32 %v560, %v562
        %v564 = vadd.f32 %v560, %v563
        %vm565 = vweird.f32 %v560
        %v566 = vsel %vm565, %v560, %v564
        %v567 = vmul.f32 %v559, %v566
        %v568 = vrsqrt.pop %v567
        %v569 = vmul.f32 %v568, %v567
        %v570 = vmul.f32 %v569, %v568
        %v571 = vmul.f32 0.5, %v570
        %v572 = vsub.f32 1.5, %v571
        %v573 = vmul.f32 %v568, %v572
        %v574 = vmul.f32 %v567, %v573
        %vm575 = vcmp.eq.f32.partialorder %v567, inf
        %v576 = vsel %vm575, %v567, %v574
        %vm577 = vcmp.eq.f32.partialorder %v567, 0.0
        %v578 = vand.u32 %v567, 2147483648
        %v579 = vsel %vm577, %v578, %v576
        %v580 = vadd.f32 %v579, 0.001
        %v581 = vrcp.pop %v580
        %v582 = vmul.f32 %v580, %v581
        %v583 = vsub.f32 1.0, %v582
        %v584 = vmul.f32 %v581, %v583
        %v585 = vadd.f32 %v581, %v584
        %vm586 = vweird.f32 %v580
        %vm587 = vweird.f32 %v581
        %vm588 = vmor %vm586, %vm587
        %v589 = vsel %vm588, %v581, %v585
        %v590 = vand.u32 2147483647, %v580
        %vm591 = vcmp.eq.f32.partialorder %v590, 8.507059e+37
        %v592 = vand.u32 %v580, 2147483648
        %v593 = vor.u32 1.1754944e-38, %v592
        %v594 = vsel %vm591, %v593, %v589
        %v595 = vmul.f32 %v555, %v594
        %v596 = vperm.slane %v541, 0
        %v597 = vmul.f32 %v595, %v596
        %v598 = vperm.slane %v542, 0
        %v599 = vadd.f32 %v597, %v598
        %v600 = vld [vmem:[%s2 + $0x1] sm:$0x1]
        %v601 = vld [vmem:[%s3 + $0x1] sm:$0x1]
        %v602 = vsel %vm543, %v497, 0.0
        %603 = vadd.xlane.f32.xlu0 %v602
        %v604 = vpop.xlane.xlu0 %603
        %v605 = vmul.f32 %v604, %v553
        %v606 = vsub.f32 %v497, %v605
        %v607 = vmul.f32 %v606, %v606
        %v608 = vsel %vm543, %v607, 0.0
        %609 = vadd.xlane.f32.xlu0 %v608
        %v610 = vpop.xlane.xlu0 %609
        %v611 = vmul.f32 %v610, %v566
        %v612 = vrsqrt.pop %v611
        %v613 = vmul.f32 %v612, %v611
        %v614 = vmul.f32 %v613, %v612
        %v615 = vmul.f32 0.5, %v614
        %v616 = vsub.f32 1.5, %v615
        %v617 = vmul.f32 %v612, %v616
        %v618 = vmul.f32 %v611, %v617
        %vm619 = vcmp.eq.f32.partialorder %v611, inf
        %v620 = vsel %vm619, %v611, %v618
        %vm621 = vcmp.eq.f32.partialorder %v611, 0.0
        %v622 = vand.u32 %v611, 2147483648
        %v623 = vsel %vm621, %v622, %v620
        %v624 = vadd.f32 %v623, 0.001
        %v625 = vrcp.pop %v624
        %v626 = vmul.f32 %v624, %v625
        %v627 = vsub.f32 1.0, %v626
        %v628 = vmul.f32 %v625, %v627
        %v629 = vadd.f32 %v625, %v628
        %vm630 = vweird.f32 %v624
        %vm631 = vweird.f32 %v625
        %vm632 = vmor %vm630, %vm631
        %v633 = vsel %vm632, %v625, %v629
        %v634 = vand.u32 2147483647, %v624
        %vm635 = vcmp.eq.f32.partialorder %v634, 8.507059e+37
        %v636 = vand.u32 %v624, 2147483648
        %v637 = vor.u32 1.1754944e-38, %v636
        %v638 = vsel %vm635, %v637, %v633
        %v639 = vmul.f32 %v606, %v638
        %v640 = vperm.slane %v600, 0
        %v641 = vmul.f32 %v639, %v640
        %v642 = vperm.slane %v601, 0
        %v643 = vadd.f32 %v641, %v642
        %v644 = vld [vmem:[%s2 + $0x2] sm:$0x1]
        %v645 = vld [vmem:[%s3 + $0x2] sm:$0x1]
        %v646 = vsel %vm543, %v539, 0.0
        %647 = vadd.xlane.f32.xlu0 %v646
        %v648 = vpop.xlane.xlu0 %647
        %v649 = vmul.f32 %v648, %v553
        %v650 = vsub.f32 %v539, %v649
        %v651 = vmul.f32 %v650, %v650
        %v652 = vsel %vm543, %v651, 0.0
        %653 = vadd.xlane.f32.xlu0 %v652
        %v654 = vpop.xlane.xlu0 %653
        %v655 = vmul.f32 %v654, %v566
        %v656 = vrsqrt.pop %v655
        %v657 = vmul.f32 %v656, %v655
        %v658 = vmul.f32 %v657, %v656
        %v659 = vmul.f32 0.5, %v658
        %v660 = vsub.f32 1.5, %v659
        %v661 = vmul.f32 %v656, %v660
        %v662 = vmul.f32 %v655, %v661
        %vm663 = vcmp.eq.f32.partialorder %v655, inf
        %v664 = vsel %vm663, %v655, %v662
        %vm665 = vcmp.eq.f32.partialorder %v655, 0.0
        %v666 = vand.u32 %v655, 2147483648
        %v667 = vsel %vm665, %v666, %v664
        %v668 = vadd.f32 %v667, 0.001
        %v669 = vrcp.pop %v668
        %v670 = vmul.f32 %v668, %v669
        %v671 = vsub.f32 1.0, %v670
        %v672 = vmul.f32 %v669, %v671
        %v673 = vadd.f32 %v669, %v672
        %vm674 = vweird.f32 %v668
        %vm675 = vweird.f32 %v669
        %vm676 = vmor %vm674, %vm675
        %v677 = vsel %vm676, %v669, %v673
        %v678 = vand.u32 2147483647, %v668
        %vm679 = vcmp.eq.f32.partialorder %v678, 8.507059e+37
        %v680 = vand.u32 %v668, 2147483648
        %v681 = vor.u32 1.1754944e-38, %v680
        %v682 = vsel %vm679, %v681, %v677
        %v683 = vmul.f32 %v650, %v682
        %v684 = vperm.slane %v644, 0
        %v685 = vmul.f32 %v683, %v684
        %v686 = vperm.slane %v645, 0
        %v687 = vadd.f32 %v685, %v686
        %689 = vrot.lane.b32.xlu0 %v643, 32
        %v690 = vpop.permute.xlu0 %689
        %693 = vrot.lane.b32.xlu0 %v687, 64
        %v694 = vpop.permute.xlu0 %693
        %697 = vrot.lane.b32.xlu0 %v540, 96
        %v698 = vpop.permute.xlu0 %697
        %v700 = vsel %vm543, %v599, %v690
        %v701 = vsel %vm438, %v700, %v694
        %vm702 = vcmask 785408
        %v703 = vsel %vm702, %v701, %v698
        %v704 = vld [vmem:[%s4] sm:$0xff]
        %v705 = vld [vmem:[%s4 + $0x8] sm:$0xff]
        %v706 = vld [vmem:[%s4 + $0x10] sm:$0xff]
        %v707 = vld [vmem:[%s4 + $0x18] sm:$0xff]
        %v708 = vld [vmem:[%s4 + $0x20] sm:$0xff]
        %v709 = vld [vmem:[%s4 + $0x28] sm:$0xff]
        %v710 = vld [vmem:[%s4 + $0x30] sm:$0xff]
        %v711 = vld [vmem:[%s4 + $0x38] sm:$0xff]
        %v712 = vld [vmem:[%s4 + $0x40] sm:$0xff]
        %v713 = vld [vmem:[%s4 + $0x48] sm:$0xff]
        %v714 = vld [vmem:[%s4 + $0x50] sm:$0xff]
        %v715 = vld [vmem:[%s4 + $0x58] sm:$0xff]
        %v716 = vld [vmem:[%s4 + $0x60] sm:$0xff]
        %v717 = vld [vmem:[%s4 + $0x68] sm:$0xff]
        %v718 = vld [vmem:[%s4 + $0x70] sm:$0xff]
        %v719 = vld [vmem:[%s4 + $0x78] sm:$0xff]
        %v720 = vld [vmem:[%s5] sm:$0x1]
        %v722 = vperm.slane %v720, 0
        %724 = vmatpush.msra.mxu0 %v719
        %725 = vmatpush.msra.mxu0 %v718
        %726 = vmatpush.msra.mxu0 %v717
        %727 = vmatpush.msra.mxu0 %v716
        %728 = vmatpush.msra.mxu0 %v715
        %729 = vmatpush.msra.mxu0 %v714
        %730 = vmatpush.msra.mxu0 %v713
        %731 = vmatpush.msra.mxu0 %v712
        %732 = vmatpush.msra.mxu0 %v711
        %733 = vmatpush.msra.mxu0 %v710
        %734 = vmatpush.msra.mxu0 %v709
        %735 = vmatpush.msra.mxu0 %v708
        %736 = vmatpush.msra.mxu0 %v707
        %737 = vmatpush.msra.mxu0 %v706
        %738 = vmatpush.msra.mxu0 %v705
        %739 = vmatpush.msra.mxu0 %v704
        %740 = vmatmul.f32.gmra.mxu0 %v703
        %v741 = vpop.f32.mrf.mxu0
        %v742 = vadd.f32 %v722, %v741
        %743 = vdwg.mxu0
        %v744 = vtanh.pop %v742
        %v745 = vxor.u32 %v742, 2147483648
        %v746 = vmul.f32 %v745, 1.442695
        %v747 = vpow.pop %v746
        %v748 = vadd.f32 %v747, 1.0
        %v749 = vrcp.pop %v748
        %v750 = vmul.f32 %v748, %v749
        %v751 = vsub.f32 1.0, %v750
        %v752 = vmul.f32 %v749, %v751
        %v753 = vadd.f32 %v749, %v752
        %vm754 = vweird.f32 %v748
        %vm755 = vweird.f32 %v749
        %vm756 = vmor %vm754, %vm755
        %v757 = vsel %vm756, %v749, %v753
        %v758 = vand.u32 2147483647, %v748
        %vm759 = vcmp.eq.f32.partialorder %v758, 8.507059e+37
        %v760 = vand.u32 %v748, 2147483648
        %v761 = vor.u32 1.1754944e-38, %v760
        %v762 = vsel %vm759, %v761, %v757
        %v763 = vmul.f32 1.0, %v762
        %765 = vrot.lane.b32.xlu0 %v763, 96
        %v766 = vpop.permute.xlu0 %765
        %v768 = vmul.f32 %v744, %v766
        %769 = vrot.lane.b32.xlu0 %v540, 32
        %v770 = vpop.permute.xlu0 %769
        %v772 = vmul.f32 %v763, %v770
        %774 = vrot.lane.b32.xlu0 %v772, 64
        %v775 = vpop.permute.xlu0 %774
        %v777 = vadd.f32 %v768, %v775
        %v778 = vtanh.pop %v777
        %780 = vrot.lane.b32.xlu0 %v778, 96
        %v781 = vpop.permute.xlu0 %780
        %v783 = vmul.f32 %v763, %v781
        %785 = vrot.lane.b32.xlu0 %v783, 32
        %v786 = vpop.permute.xlu0 %785
        %789 = vrot.lane.b32.xlu0 %v777, 32
        %v790 = vpop.permute.xlu0 %789
        %v792 = vsel %vm543, %v786, %v790
        %793 = vst.msk [vmem:[#allocation3] sm:$0xff] %vm438, %v792
        %v794 = vld [vmem:[%s6] sm:$0xff]
        %v795 = vld [vmem:[%s6 + $0x8] sm:$0xff]
        %v796 = vld [vmem:[%s6 + $0x10] sm:$0xff]
        %v797 = vld [vmem:[%s6 + $0x18] sm:$0xff]
        %v798 = vld [vmem:[%s6 + $0x20] sm:$0xff]
        %v799 = vld [vmem:[%s6 + $0x28] sm:$0xff]
        %v800 = vld [vmem:[%s6 + $0x30] sm:$0xff]
        %v801 = vld [vmem:[%s6 + $0x38] sm:$0xff]
        %v802 = vld [vmem:[%s7] sm:$0x1]
        %v804 = vperm.slane %v802, 0
        %v807 = vsel %vm438, %v792, 0
        %809 = vmatpush.msra.mxu0 0.0
        %810 = vmatpush.msra.mxu0 0.0
        %811 = vmatpush.msra.mxu0 0.0
        %812 = vmatpush.msra.mxu0 0.0
        %813 = vmatpush.msra.mxu0 0.0
        %814 = vmatpush.msra.mxu0 0.0
        %815 = vmatpush.msra.mxu0 0.0
        %816 = vmatpush.msra.mxu0 0.0
        %817 = vmatpush.msra.mxu0 %v801
        %818 = vmatpush.msra.mxu0 %v800
        %819 = vmatpush.msra.mxu0 %v799
        %820 = vmatpush.msra.mxu0 %v798
        %821 = vmatpush.msra.mxu0 %v797
        %822 = vmatpush.msra.mxu0 %v796
        %823 = vmatpush.msra.mxu0 %v795
        %824 = vmatpush.msra.mxu0 %v794
        %825 = vmatmul.f32.gmra.mxu0 %v807
        %v826 = vpop.f32.mrf.mxu0
        %v827 = vadd.f32 %v804, %v826
        %828 = vdwg.mxu0
        %vm829 = vcmask 15360
        %v830 = vsel %vm829, %v827, -inf
        %831 = vmax.xlane.f32.xlu0 %v830
        %v832 = vpop.xlane.xlu0 %831
        %v833 = vsub.f32 %v827, %v832
        %v834 = vmul.f32 %v833, 1.442695
        %v835 = vpow.pop %v834
        %v836 = vsel %vm829, %v835, 0.0
        %837 = vadd.xlane.f32.xlu0 %v836
        %v838 = vpop.xlane.xlu0 %837
        %v839 = vlog2.pop %v838
        %v840 = vmul.f32 %v839, 0.6931472
        %v841 = vsub.f32 %v833, %v840
        %843 = vrot.lane.b32.xlu0 %v841, 64
        %v844 = vpop.permute.xlu0 %843
        %v846 = vsel %vm438, %v792, %v844
        %vm847 = vcmask 539648
        %v848 = vsel %vm847, %v846, 0.0
        %849 = vst [vmem:[%s374] sm:$0xff] %v848
        %851 = vrot.lane.b32.xlu0 %v497, 32
        %v852 = vpop.permute.xlu0 %851
        %854 = vrot.lane.b32.xlu0 %v783, 96
        %v855 = vpop.permute.xlu0 %854
        %857 = vrot.lane.b32.xlu0 %v777, 96
        %v858 = vpop.permute.xlu0 %857
        %v860 = vsel %vm543, %v539, %v852
        %v861 = vsel %vm438, %v860, %v855
        %v862 = vsel %vm702, %v861, %v858
        %v863 = vld [vmem:[%s8] sm:$0xff]
        %v864 = vld [vmem:[%s8 + $0x8] sm:$0xff]
        %v865 = vld [vmem:[%s8 + $0x10] sm:$0xff]
        %v866 = vld [vmem:[%s8 + $0x18] sm:$0xff]
        %v867 = vld [vmem:[%s8 + $0x20] sm:$0xff]
        %v868 = vld [vmem:[%s8 + $0x28] sm:$0xff]
        %v869 = vld [vmem:[%s8 + $0x30] sm:$0xff]
        %v870 = vld [vmem:[%s8 + $0x38] sm:$0xff]
        %v871 = vld [vmem:[%s8 + $0x40] sm:$0xff]
        %v872 = vld [vmem:[%s8 + $0x48] sm:$0xff]
        %v873 = vld [vmem:[%s8 + $0x50] sm:$0xff]
        %v874 = vld [vmem:[%s8 + $0x58] sm:$0xff]
        %v875 = vld [vmem:[%s8 + $0x60] sm:$0xff]
        %v876 = vld [vmem:[%s8 + $0x68] sm:$0xff]
        %v877 = vld [vmem:[%s8 + $0x70] sm:$0xff]
        %v878 = vld [vmem:[%s8 + $0x78] sm:$0xff]
        %v879 = vld [vmem:[%s8 + $0x80] sm:$0xff]
        %v880 = vld [vmem:[%s8 + $0x88] sm:$0xff]
        %v881 = vld [vmem:[%s8 + $0x90] sm:$0xff]
        %v882 = vld [vmem:[%s8 + $0x98] sm:$0xff]
        %v883 = vld [vmem:[%s8 + $0xa0] sm:$0xff]
        %v884 = vld [vmem:[%s8 + $0xa8] sm:$0xff]
        %v885 = vld [vmem:[%s8 + $0xb0] sm:$0xff]
        %v886 = vld [vmem:[%s8 + $0xb8] sm:$0xff]
        %v887 = vld [vmem:[%s8 + $0xc0] sm:$0xff]
        %v888 = vld [vmem:[%s8 + $0xc8] sm:$0xff]
        %v889 = vld [vmem:[%s8 + $0xd0] sm:$0xff]
        %v890 = vld [vmem:[%s8 + $0xd8] sm:$0xff]
        %v891 = vld [vmem:[%s8 + $0xe0] sm:$0xff]
        %v892 = vld [vmem:[%s8 + $0xe8] sm:$0xff]
        %v893 = vld [vmem:[%s8 + $0xf0] sm:$0xff]
        %v894 = vld [vmem:[%s8 + $0xf8] sm:$0xff]
        %v895 = vld [vmem:[%s9] sm:$0x3]
        %v897 = vperm.slane %v895, 0
        %v898 = vperm.slane %v895, 1
        %901 = vmatpush.msra.mxu0 %v893
        %902 = vmatpush.msra.mxu0 %v891
        %903 = vmatpush.msra.mxu0 %v889
        %904 = vmatpush.msra.mxu0 %v887
        %905 = vmatpush.msra.mxu0 %v885
        %906 = vmatpush.msra.mxu0 %v883
        %907 = vmatpush.msra.mxu0 %v881
        %908 = vmatpush.msra.mxu0 %v879
        %909 = vmatpush.msra.mxu0 %v877
        %910 = vmatpush.msra.mxu0 %v875
        %911 = vmatpush.msra.mxu0 %v873
        %912 = vmatpush.msra.mxu0 %v871
        %913 = vmatpush.msra.mxu0 %v869
        %914 = vmatpush.msra.mxu0 %v867
        %915 = vmatpush.msra.mxu0 %v865
        %916 = vmatpush.msra.mxu0 %v863
        %917 = vmatmul.f32.gmra.mxu0 %v862
        %v918 = vpop.f32.mrf.mxu0
        %v919 = vadd.f32 %v897, %v918
        %920 = vdwg.mxu0
        %921 = vmatpush.msra.mxu0 %v894
        %922 = vmatpush.msra.mxu0 %v892
        %923 = vmatpush.msra.mxu0 %v890
        %924 = vmatpush.msra.mxu0 %v888
        %925 = vmatpush.msra.mxu0 %v886
        %926 = vmatpush.msra.mxu0 %v884
        %927 = vmatpush.msra.mxu0 %v882
        %928 = vmatpush.msra.mxu0 %v880
        %929 = vmatpush.msra.mxu0 %v878
        %930 = vmatpush.msra.mxu0 %v876
        %931 = vmatpush.msra.mxu0 %v874
        %932 = vmatpush.msra.mxu0 %v872
        %933 = vmatpush.msra.mxu0 %v870
        %934 = vmatpush.msra.mxu0 %v868
        %935 = vmatpush.msra.mxu0 %v866
        %936 = vmatpush.msra.mxu0 %v864
        %937 = vmatmul.f32.gmra.mxu0 %v862
        %v938 = vpop.f32.mrf.mxu0
        %v939 = vadd.f32 %v898, %v938
        %940 = vdwg.mxu0
        %v941 = vxor.u32 %v919, 2147483648
        %v942 = vmul.f32 %v941, 1.442695
        %v943 = vpow.pop %v942
        %v944 = vadd.f32 %v943, 1.0
        %v945 = vrcp.pop %v944
        %v946 = vmul.f32 %v944, %v945
        %v947 = vsub.f32 1.0, %v946
        %v948 = vmul.f32 %v945, %v947
        %v949 = vadd.f32 %v945, %v948
        %vm950 = vweird.f32 %v944
        %vm951 = vweird.f32 %v945
        %vm952 = vmor %vm950, %vm951
        %v953 = vsel %vm952, %v945, %v949
        %v954 = vand.u32 2147483647, %v944
        %vm955 = vcmp.eq.f32.partialorder %v954, 8.507059e+37
        %v956 = vand.u32 %v944, 2147483648
        %v957 = vor.u32 1.1754944e-38, %v956
        %v958 = vsel %vm955, %v957, %v953
        %v959 = vmul.f32 1.0, %v958
        %v960 = vtanh.pop %v919
        %v961 = vxor.u32 %v939, 2147483648
        %v962 = vmul.f32 %v961, 1.442695
        %v963 = vpow.pop %v962
        %v964 = vadd.f32 %v963, 1.0
        %v965 = vrcp.pop %v964
        %v966 = vmul.f32 %v964, %v965
        %v967 = vsub.f32 1.0, %v966
        %v968 = vmul.f32 %v965, %v967
        %v969 = vadd.f32 %v965, %v968
        %vm970 = vweird.f32 %v964
        %vm971 = vweird.f32 %v965
        %vm972 = vmor %vm970, %vm971
        %v973 = vsel %vm972, %v965, %v969
        %v974 = vand.u32 2147483647, %v964
        %vm975 = vcmp.eq.f32.partialorder %v974, 8.507059e+37
        %v976 = vand.u32 %v964, 2147483648
        %v977 = vor.u32 1.1754944e-38, %v976
        %v978 = vsel %vm975, %v977, %v973
        %v979 = vmul.f32 1.0, %v978
        %v980 = vmul.f32 %v959, %v539
        %v981 = vmul.f32 %v959, %v852
        %983 = vrot.lane.b32.xlu0 %v981, 96
        %v984 = vpop.permute.xlu0 %983
        %v986 = vadd.f32 %v980, %v984
        %988 = vrot.lane.b32.xlu0 %v960, 32
        %v989 = vpop.permute.xlu0 %988
        %v991 = vmul.f32 %v959, %v989
        %993 = vrot.lane.b32.xlu0 %v991, 32
        %v994 = vpop.permute.xlu0 %993
        %v996 = vadd.f32 %v986, %v994
        %v997 = vtanh.pop %v996
        %999 = vrot.lane.b32.xlu0 %v997, 96
        %v1000 = vpop.permute.xlu0 %999
        %v1002 = vmul.f32 %v979, %v1000
        %v1003 = vsel %vm543, %v1002, %v996
        %vm1004 = vcmp.eq.s32.totalorder %v397, 1
        %v1005 = vsel %vm1004, 1, 0
        %1006 = vset.pattern.permute.xlu0 0
        %1007 = vperm.xlu0 %1006, %v1005
        %v1008 = vpop.permute.xlu0 %1007
        %vm1009 = vcmp.eq.s32.totalorder %v1008, 1
        %v1010 = vsel %vm1009, %v1003, %v455
        %1011 = vset.pattern.permute.xlu0 4
        %1012 = vperm.xlu0 %1011, %v397
        %v1013 = vpop.permute.xlu0 %1012
        %vm1014 = vcmp.eq.s32.totalorder %v1013, 0
        %vm1015 = vcmp.eq.s32.totalorder %v1013, 1
        %vm1016 = vcmp.eq.s32.totalorder %v1013, 2
        %vm1017 = vcmp.eq.s32.totalorder %v1013, 3
        %vm1018 = vcmp.eq.s32.totalorder %v1013, 4
        %vm1019 = vcmp.eq.s32.totalorder %v1013, 5
        %vm1020 = vcmp.eq.s32.totalorder %v1013, 6
        %vm1021 = vcmp.eq.s32.totalorder %v1013, 7
        %vm1022 = vcmp.eq.s32.totalorder %v1013, 8
        %vm1023 = vcmp.eq.s32.totalorder %v1013, 9
        %vm1024 = vcmp.ne.s32.totalorder %v397, 2
        %v1025 = vsel %vm1024, 1, 0
        %1026 = vset.pattern.permute.xlu0 0
        %1027 = vperm.xlu0 %1026, %v1025
        %v1028 = vpop.permute.xlu0 %1027
        %vm1029 = vcmp.eq.s32.totalorder %v1028, 1
        %vm1030 = vmand %vm1014, %vm1029
        %vm1031 = vmand %vm1015, %vm1029
        %vm1032 = vmand %vm1016, %vm1029
        %vm1033 = vmand %vm1017, %vm1029
        %vm1034 = vmand %vm1018, %vm1029
        %vm1035 = vmand %vm1019, %vm1029
        %vm1036 = vmand %vm1020, %vm1029
        %vm1037 = vmand %vm1021, %vm1029
        %vm1038 = vmand %vm1022, %vm1029
        %vm1039 = vmand %vm1023, %vm1029
        %v1040 = vsel %vm1030, %v1010, %v407
        %v1041 = vsel %vm1031, %v1010, %v408
        %v1042 = vsel %vm1032, %v1010, %v409
        %v1043 = vsel %vm1033, %v1010, %v410
        %v1044 = vsel %vm1034, %v1010, %v411
        %v1045 = vsel %vm1035, %v1010, %v412
        %v1046 = vsel %vm1036, %v1010, %v413
        %v1047 = vsel %vm1037, %v1010, %v414
        %v1048 = vsel %vm1038, %v1010, %v415
        %v1049 = vsel %vm1039, %v1010, %v416
        %1050 = vst.msk [vmem:[#allocation2] sm:$0xff] %vm438, %v1040
        %1051 = vst.msk [vmem:[#allocation2 + $0x8] sm:$0xff] %vm438, %v1041
        %1052 = vst.msk [vmem:[#allocation2 + $0x10] sm:$0xff] %vm438, %v1042
        %1053 = vst.msk [vmem:[#allocation2 + $0x18] sm:$0xff] %vm438, %v1043
        %1054 = vst.msk [vmem:[#allocation2 + $0x20] sm:$0xff] %vm438, %v1044
        %1055 = vst.msk [vmem:[#allocation2 + $0x28] sm:$0xff] %vm438, %v1045
        %1056 = vst.msk [vmem:[#allocation2 + $0x30] sm:$0xff] %vm438, %v1046
        %1057 = vst.msk [vmem:[#allocation2 + $0x38] sm:$0xff] %vm438, %v1047
        %1058 = vst.msk [vmem:[#allocation2 + $0x40] sm:$0xff] %vm438, %v1048
        %1059 = vst.msk [vmem:[#allocation2 + $0x48] sm:$0xff] %vm438, %v1049
        %p1060 = scmp.eq.s32.totalorder %s27, 6
        // Predicated region
        $region65: #{_spinn_run.1} parent=59 // pred_check
          %p1061 = pneg %p1060
        $region66: #{_spinn_run.1} parent=59 // pred_check_branch
          %1063 = sbr.rel (%p1061) target = $region68
        $region67: #{_spinn_run.1} parent=59 // pred_region
          %1064 = vset.pattern.permute.xlu0 5
          %1065 = vperm.xlu0 %1064, %v397
          %v1066 = vpop.permute.xlu0 %1065
          %vm1067 = vcmp.eq.s32.totalorder %v1066, 0
          %vm1068 = vcmp.eq.s32.totalorder %v1066, 1
          %vm1069 = vcmp.eq.s32.totalorder %v1066, 2
          %vm1070 = vcmp.eq.s32.totalorder %v1066, 3
          %vm1071 = vcmp.eq.s32.totalorder %v1066, 4
          %vm1072 = vcmp.eq.s32.totalorder %v1066, 5
          %vm1073 = vcmp.eq.s32.totalorder %v1066, 6
          %vm1074 = vcmp.eq.s32.totalorder %v1066, 7
          %vm1075 = vcmp.eq.s32.totalorder %v1066, 8
          %vm1076 = vcmp.eq.s32.totalorder %v1066, 9
          %v1077 = vsel %vm1067, %v1040, 0.0
          %v1078 = vsel %vm1068, %v1041, 0.0
          %v1079 = vsel %vm1069, %v1042, 0.0
          %v1080 = vsel %vm1070, %v1043, 0.0
          %v1081 = vsel %vm1071, %v1044, 0.0
          %v1082 = vsel %vm1072, %v1045, 0.0
          %v1083 = vsel %vm1073, %v1046, 0.0
          %v1084 = vsel %vm1074, %v1047, 0.0
          %v1085 = vsel %vm1075, %v1048, 0.0
          %v1086 = vsel %vm1076, %v1049, 0.0
          %v1087 = vsel %vm438, %v1077, 0.0
          %v1088 = vsel %vm438, %v1078, 0.0
          %v1089 = vadd.f32 %v1087, %v1088
          %v1090 = vsel %vm438, %v1079, 0.0
          %v1091 = vadd.f32 %v1089, %v1090
          %v1092 = vsel %vm438, %v1080, 0.0
          %v1093 = vadd.f32 %v1091, %v1092
          %v1094 = vsel %vm438, %v1081, 0.0
          %v1095 = vadd.f32 %v1093, %v1094
          %v1096 = vsel %vm438, %v1082, 0.0
          %v1097 = vadd.f32 %v1095, %v1096
          %v1098 = vsel %vm438, %v1083, 0.0
          %v1099 = vadd.f32 %v1097, %v1098
          %v1100 = vsel %vm438, %v1084, 0.0
          %v1101 = vadd.f32 %v1099, %v1100
          %v1102 = vsel %vm438, %v1085, 0.0
          %v1103 = vadd.f32 %v1101, %v1102
          %v1104 = vsel %vm438, %v1086, 0.0
          %v1105 = vadd.f32 %v1103, %v1104
          %1106 = vst.msk [vmem:[#allocation6] sm:$0xff] %vm438, %v1105
        $region68: #{_spinn_run.1} parent=59 // pred_fallthru
          _
        %s1107 = sand.u32 %s250, 1
        %s1108 = scalar_lea.sflag [#allocation5], %s1107
        %s1109 = sand.u32 %s250, 1
        %s1110 = smul.addr %s1109, 8
        %s1111 = scalar_lea.vmem [#allocation4], %s1110
        // Predicated region
        $region69: #{_spinn_run.1} parent=59 // pred_check
          %p1112 = pneg %p260
        $region70: #{_spinn_run.1} parent=59 // pred_check_branch
          %1114 = sbr.rel (%p1112) target = $region72
        $region71: #{_spinn_run.1} parent=59 // pred_region
          %1116 = vsyncadd %s1108, 0
          %s1117 = smul.addr %s27, 8
          %s1118 = scalar_lea.hbm %s10, %s1117
          %s1120 = sshll.u32 %s1111, 4
          %s1121 = int_to_ptr.vmem [resolvable:$true] %s1120
          %s1122 = sshll.u32 %s1118, 4
          %s1123 = int_to_ptr.hbm [resolvable:$true] %s1122
          %1125 = dma.vmem_to_hbm [thread:$0]  %s1121, 128, %s1123, %s1108
        $region72: #{_spinn_run.1} parent=59 // pred_fallthru
          _
        // Predicated region
        $region73: #{_spinn_run.1} parent=59 // pred_check
          %p1126 = pneg %p281
        $region74: #{_spinn_run.1} parent=59 // pred_check_branch
          %1128 = sbr.rel (%p1126) target = $region76
        $region75: #{_spinn_run.1} parent=59 // pred_region
          %1130 = vsyncadd [#allocation7], 0
          %s1132 = sshll.u32 [#allocation6], 4
          %s1133 = int_to_ptr.vmem [resolvable:$true] %s1132
          %s1134 = sshll.u32 %s11, 4
          %s1135 = int_to_ptr.hbm [resolvable:$true] %s1134
          %1137 = dma.vmem_to_hbm [thread:$0]  %s1133, 128, %s1135, [#allocation7]
        $region76: #{_spinn_run.1} parent=59 // pred_fallthru
          _
        // Predicated region
        $region77: #{_spinn_run.1} parent=59 // pred_check
          %p1138 = pneg %p281
        $region78: #{_spinn_run.1} parent=59 // pred_check_branch
          %1140 = sbr.rel (%p1138) target = $region80
        $region79: #{_spinn_run.1} parent=59 // pred_region
          %1142 = dma.done [#allocation7], 128
        $region80: #{_spinn_run.1} parent=59 // pred_fallthru
          _
      $region60: #{_spinn_run.1} parent=5 // pred_fallthru
        _
      %p1143 = scmp.le.s32.totalorder 2, %s22
      // Predicated region
      $region81: #{_spinn_run.1} parent=5 // pred_check
        %p1144 = pneg %p1143
      $region82: #{_spinn_run.1} parent=5 // pred_check_branch
        %1146 = sbr.rel (%p1144) target = $region84
      $region83: #{_spinn_run.1} parent=5 // pred_region
        %s1147 = ssub.s32 %s22, 2
        // Predicated region
        $region85: #{_spinn_run.1} parent=83 // pred_check
          %p1148 = pneg %p266
        $region86: #{_spinn_run.1} parent=83 // pred_check_branch
          %1150 = sbr.rel (%p1148) target = $region88
        $region87: #{_spinn_run.1} parent=83 // pred_region
          %s1151 = sand.u32 %s251, 1
          %s1152 = scalar_lea.sflag [#allocation5], %s1151
          %s1153 = sand.u32 %s251, 1
          %s1154 = smul.addr %s1153, 8
          %s1155 = scalar_lea.vmem [#allocation4], %s1154
          %1157 = dma.done %s1152, 128
        $region88: #{_spinn_run.1} parent=83 // pred_fallthru
          _
      $region84: #{_spinn_run.1} parent=5 // pred_fallthru
        _
    $region6: #{_spinn_run.1} parent=1 // loop_footer
      %s26 = sadd.s32 1, %s22
    $region7: #{_spinn_run.1} parent=1 // loop_footer_branch
      %21 = sbr.rel target = $region3
    $region8: #{_spinn_run.1} parent=1 // loop_exit
      _
    %1158 = vsyncpa [#allocation5], 1
    %s1159 = scalar_lea.sflag [#allocation5], 1
    %1160 = vsyncpa %s1159, 1
    %1161 = vsyncpa [#allocation7], 1

</llo_original>
